<compile_context>
chip_gen: v7x
topology: tpu7x:2x2x1
jax: 0.10.0
libtpu: 0.0.40
codegen_flags: <defaults>
</compile_context>

<pallas_src>
import math
import functools

import jax
import jax.numpy as jnp
from jax.experimental import pallas as pl
from jax.experimental.pallas import tpu as pltpu

BACKOFF_PROB = 1e-10


def _round_up(x, m):
    return ((x + m - 1) // m) * m


def nce_kernel(h_ref, wn_t_ref, wt_ref, bt_ref, bn_ref, out_ref, *,
               num_valid_rows, block_rows, compute_dtype):
    """One R-tile of the NCE loss; emits the tile's partial loss sum."""
    tr = block_rows
    groups = tr // 128
    hdim = h_ref.shape[1]

    h_bf = h_ref[...]                                                  # (TR, H) bf16

    # ---- noise logits: (TR,H)@(H,K) on the MXU (bf16 in, f32 acc) + folded bias.
    x_n = (jnp.dot(h_bf, wn_t_ref[...], preferred_element_type=jnp.float32)
           + bn_ref[...])                                              # (TR, K) f32
    x_n = x_n.astype(compute_dtype)

    # ---- noise columns (label 0): softplus(x) = max(x,0) + log(1+exp(-|x|)).
    # abs/neg/max/exp in compute_dtype (bf16 on v6e/v7x); +1/log and sums in f32.
    e_n = jnp.exp(-jnp.abs(x_n))
    bce_n = (jnp.maximum(x_n, 0.0).astype(jnp.float32)
             + jnp.log(1.0 + e_n.astype(jnp.float32)))                 # (TR, K) f32
    noise_rows = jnp.sum(bce_n, axis=-1, keepdims=True)                # (TR, 1) f32

    # ---- target column (label 1), LANE-DENSE: view the TR rows as (TR//128, 128) so
    # the per-row logit and its softplus fill full vregs (a (TR,1) column would waste
    # 127/128 of the EUP work, which is the saturating slot at K=128).
    h3 = h_bf.reshape(groups, 128, hdim).astype(compute_dtype)         # free reshape
    wt3 = wt_ref[...].reshape(groups, 128, hdim).astype(compute_dtype)
    x_t = jnp.sum((h3 * wt3).astype(jnp.float32), axis=-1) + bt_ref[...]   # (G,128) f32
    x_t = x_t.astype(compute_dtype)
    e_t = jnp.exp(-jnp.abs(x_t))
    bce_t = (jnp.maximum(-x_t, 0.0).astype(jnp.float32)
             + jnp.log(1.0 + e_t.astype(jnp.float32)))                 # (G, 128) f32

    # ---- drop rows past num_valid_rows (last tile reads OOB garbage; no glue pad).
    start = pl.program_id(0) * tr
    rid2d = (start
             + 128 * jax.lax.broadcasted_iota(jnp.int32, (groups, 128), 0)
             + jax.lax.broadcasted_iota(jnp.int32, (groups, 128), 1))
    rid_col = start + jax.lax.broadcasted_iota(jnp.int32, (tr, 1), 0)
    t_sum = jnp.sum(jnp.where(rid2d < num_valid_rows, bce_t, 0.0))
    n_sum = jnp.sum(jnp.where(rid_col < num_valid_rows, noise_rows, 0.0))

    # ---- per-tile partial sum, broadcast into a lane-dense (1,8,128) output block.
    out_ref[...] = jnp.broadcast_to(t_sum + n_sum, out_ref.shape)


def _vmem_limit_bytes(device_kind):
    """Per-generation scoped-VMEM limit (leave headroom below physical)."""
    phys = None
    try:
        phys = getattr(pltpu.get_tpu_info(), "vmem_capacity_bytes", None)
    except Exception:
        phys = None
    if not phys:
        phys = (64 if "v7" in device_kind else 128) * 1024 * 1024
    return int(min(int(phys) * 5 // 8, 96 * 1024 * 1024))   # ~40 MiB v7x, ~80 MiB v5e/v6e


def nce_mean_loss_pallas(h, w_noise_t, w_target, b_eff_target, b_eff_noise, *,
                         num_valid_rows, block_rows=1024):
    """Mean NCE loss over `num_valid_rows` rows (R = batch*seq)."""
    R, H = h.shape
    K = w_noise_t.shape[1]

    device_kind = jax.devices()[0].device_kind.lower()
    # bf16 VALU/EUP element-wise path on v6e/v7x; v5e has no bf16 VPU/EUP -> keep f32.
    compute_dtype = (jnp.bfloat16 if ("v6" in device_kind or "v7" in device_kind)
                     else jnp.float32)
    vmem_limit = _vmem_limit_bytes(device_kind)

    # Honest per-tile VMEM accounting: streamed inputs and resident noise operands are
    # both double-buffered by default, plus f32/bf16 intermediates of the (TR,K) slab.
    def tile_bytes(t):
        streamed = 2 * (2 * t * H * 2 + t * 4)                # h, W[target] (bf16), b_eff_target
        resident = 2 * (H * K * 2 + 8 * max(K, 128) * 4)      # W_noise^T, b_eff_noise
        interm = 3 * t * K * 4 + 2 * t * K * 2 + 4 * t * H * 4
        return streamed + resident + interm + 2 * 8 * 128 * 4

    # Row-tile size: multiple of 128 (lane-dense target path), target 512-1024 rows,
    # shrunk until it fits the per-generation VMEM budget.
    tr = max(128, min(_round_up(block_rows, 128), _round_up(R, 128)))
    budget = int(vmem_limit * 0.75)
    while tr > 128 and tile_bytes(tr) > budget:
        tr = max(128, _round_up(tr // 2, 128))

    num_tiles = (R + tr - 1) // tr
    groups = tr // 128

    # b_eff_target: tiny (R,) vector -> padded, lane-dense (num_tiles, TR//128, 128)
    # slab. The big (R,H) slabs are NOT padded; the last tile's OOB rows are masked.
    bt = jnp.pad(b_eff_target.reshape(-1).astype(jnp.float32),
                 (0, num_tiles * tr - R)).reshape(num_tiles, groups, 128)
    bn = b_eff_noise.reshape(1, K).astype(jnp.float32)

    kernel = functools.partial(nce_kernel, num_valid_rows=num_valid_rows,
                               block_rows=tr, compute_dtype=compute_dtype)
    grid_spec = pltpu.PrefetchScalarGridSpec(
        num_scalar_prefetch=0,
        grid=(num_tiles,),
        in_specs=[
            pl.BlockSpec((tr, H), lambda i: (i, 0)),                 # h            (streamed, bf16)
            pl.BlockSpec((H, K), lambda i: (0, 0)),                  # W_noise^T    (resident, bf16)
            pl.BlockSpec((tr, H), lambda i: (i, 0)),                 # W[target]    (streamed, bf16)
            pl.BlockSpec((None, groups, 128), lambda i: (i, 0, 0)),  # b_eff_target (lane-dense f32)
            pl.BlockSpec((1, K), lambda i: (0, 0)),                  # b_eff_noise  (resident, f32)
        ],
        out_specs=pl.BlockSpec((1, 8, 128), lambda i: (i, 0, 0)),
    )
    cost = pl.CostEstimate(
        flops=2 * num_valid_rows * H * (K + 1),
        transcendentals=2 * num_valid_rows * (K + 1),
        bytes_accessed=(2 * R * H * 2 + H * K * 2 + num_tiles * tr * 4 + K * 4
                        + num_tiles * 8 * 128 * 4),
    )
    partial_sums = pl.pallas_call(
        kernel,
        out_shape=jax.ShapeDtypeStruct((num_tiles, 8, 128), jnp.float32),
        grid_spec=grid_spec,
        compiler_params=pltpu.CompilerParams(
            dimension_semantics=("parallel",),       # independent R tiles
            vmem_limit_bytes=vmem_limit),
        cost_estimate=cost,
    )(h, w_noise_t, w_target, bt, bn)

    # Each tile wrote its partial sum to every entry of its (8,128) block.
    return jnp.sum(partial_sums[:, 0, 0]) / num_valid_rows


if __name__ == "__main__":
    # Small, deterministic shapes. N=96 -> R=192 rows so the 128-row demo tile size
    # gives a 2-tile grid whose last tile is partial (OOB rows masked in-kernel).
    B, N, H, V, K = 2, 96, 32, 50, 128   # batch, seq, hidden, vocab, noise_ratio

    key = jax.random.PRNGKey(0)
    k1, k2, k3, k4, k5, k6 = jax.random.split(key, 6)

    # ---- NCELoss.__init__ glue ----------------------------------------
    noise = jax.random.uniform(k1, (V,), minval=0.1, maxval=1.0, dtype=jnp.float32)
    probs = noise / noise.sum()
    probs = jnp.maximum(probs, BACKOFF_PROB)
    probs = probs / probs.sum()
    logprob_noise = jnp.log(probs)                     # (V,)
    norm_term = math.log(V)                            # norm_term='auto'
    log_k = math.log(K)

    # ---- inputs ---------------------------------------------------------
    target = jax.random.randint(k2, (B, N), 0, V, dtype=jnp.int32)       # (B, N)
    h = jax.random.normal(k3, (B, N, H), dtype=jnp.float32)              # model hidden
    W = 0.1 * jax.random.normal(k4, (V, H), dtype=jnp.float32)           # scorer weights
    bias = 0.1 * jax.random.normal(k5, (V,), dtype=jnp.float32)          # scorer bias

    # get_noise: per_word=False -> draw K samples once, shared over (B, N).
    # TODO(synk): AliasMultinomial sampler replaced by jax.random.categorical
    # (identical distribution, different sampling algorithm).
    noise_ids = jax.random.categorical(
        k6, jnp.broadcast_to(logprob_noise, (K, V)), axis=-1).astype(jnp.int32)  # (K,)

    # ---- glue: gathers + constant folding (norm_term, log k, log q_noise) ----
    # TODO(synk): the W[target]/bias[target] gathers stay in XLA glue; on v5e an
    # in-kernel gather (scalar-prefetched target ids + per-tile DMA gather) would
    # halve the streamed HBM bytes per tile.
    R = B * N
    t_flat = target.reshape(R)
    h_flat = h.reshape(R, H)
    b_eff_target = (bias[t_flat] - logprob_noise[t_flat]
                    - norm_term - log_k).astype(jnp.float32)            # (R,)
    b_eff_noise = (bias[noise_ids] - logprob_noise[noise_ids]
                   - norm_term - log_k).astype(jnp.float32)             # (K,)
    # One-time O(K*H) transpose in glue so the kernel feeds the MXU directly.
    w_noise_t = W[noise_ids].T.astype(jnp.bfloat16)        # (H, K)
    w_target = W[t_flat].astype(jnp.bfloat16)              # (R, H)
    h_bf = h_flat.astype(jnp.bfloat16)                     # (R, H)

    # block_rows=128 on purpose: exercises the multi-tile grid and the partial
    # (OOB-read, masked) last tile at this small demo size (production default 1024).
    loss = nce_mean_loss_pallas(h_bf, w_noise_t, w_target, b_eff_target, b_eff_noise,
                                num_valid_rows=R, block_rows=128)
    loss = jax.block_until_ready(loss)

    # ---- pure-JAX f32 reference (bf16 MXU/EUP operands -> loosened tolerance) ----
    target_score_ref = jnp.sum(h_flat * W[t_flat], axis=-1) + bias[t_flat]       # (R,)
    noise_score_ref = h_flat @ W[noise_ids].T + bias[noise_ids][None, :]         # (R, K)
    x_t_ref = (target_score_ref - norm_term) - logprob_noise[t_flat] - log_k
    x_n_ref = (noise_score_ref - norm_term) - logprob_noise[noise_ids][None, :] - log_k
    bce_t_ref = jnp.maximum(-x_t_ref, 0.0) + jnp.log1p(jnp.exp(-jnp.abs(x_t_ref)))
    bce_n_ref = jnp.maximum(x_n_ref, 0.0) + jnp.log1p(jnp.exp(-jnp.abs(x_n_ref)))
    loss_ref = jnp.mean(bce_t_ref + jnp.sum(bce_n_ref, axis=-1))

    assert jnp.allclose(loss, loss_ref, rtol=1e-2, atol=1e-2), (loss, loss_ref)
    print("KERNEL_OK")
</pallas_src>

<mosaic_0001>
module attributes {stable_mosaic.version = 11 : i64} {
  func.func @nce_kernel(%arg0: i32, %arg1: memref<128x32xbf16, #tpu.memory_space<vmem>>, %arg2: memref<32x128xbf16, #tpu.memory_space<vmem>>, %arg3: memref<128x32xbf16, #tpu.memory_space<vmem>>, %arg4: memref<1x1x128xf32, #tpu.memory_space<vmem>>, %arg5: memref<1x128xf32, #tpu.memory_space<vmem>>, %arg6: memref<1x8x128xf32, #tpu.memory_space<vmem>>) attributes {dimension_semantics = [#tpu.dimension_semantics<parallel>], iteration_bounds = array<i64: 2>, scalar_prefetch = 0 : i64, scratch_operands = 0 : i64, tpu.core_type = #tpu.core_type<tc>, window_params = [{transform_indices = @transform_0, window_bounds = array<i64: 128, 32>}, {pipeline_mode = #tpu.pipeline_mode<synchronous>, transform_indices = @transform_1, window_bounds = array<i64: 32, 128>}, {transform_indices = @transform_2, window_bounds = array<i64: 128, 32>}, {transform_indices = @transform_3, window_bounds = array<i64: 1, 1, 128>}, {pipeline_mode = #tpu.pipeline_mode<synchronous>, transform_indices = @transform_4, window_bounds = array<i64: 1, 128>}, {transform_indices = @transform_5, window_bounds = array<i64: 1, 8, 128>}]} {
    %c0 = arith.constant 0 : index
    %c0_0 = arith.constant 0 : index
    %0 = vector.load %arg1[%c0, %c0_0] : memref<128x32xbf16, #tpu.memory_space<vmem>>, vector<128x32xbf16>
    %c0_1 = arith.constant 0 : index
    %c0_2 = arith.constant 0 : index
    %1 = vector.load %arg2[%c0_1, %c0_2] : memref<32x128xbf16, #tpu.memory_space<vmem>>, vector<32x128xbf16>
    %cst = arith.constant dense<0.000000e+00> : vector<128x128xf32>
    %2 = tpu.matmul %0, %1, %cst {dimension_numbers = #tpu.dot_dimension_numbers<[1], [0], [0], [1], [0, 0, 1, 1], [], []>} : vector<128x32xbf16>, vector<32x128xbf16>, vector<128x128xf32> -> vector<128x128xf32>
    %c0_3 = arith.constant 0 : index
    %c0_4 = arith.constant 0 : index
    %3 = vector.load %arg5[%c0_3, %c0_4] : memref<1x128xf32, #tpu.memory_space<vmem>>, vector<1x128xf32>
    %4 = vector.broadcast %3 : vector<1x128xf32> to vector<128x128xf32>
    %5 = arith.addf %2, %4 : vector<128x128xf32>
    %6 = math.absf %5 : vector<128x128xf32>
    %cst_5 = arith.constant 0.000000e+00 : f32
    %7 = vector.broadcast %cst_5 : f32 to vector<128x128xf32>
    %8 = arith.subf %7, %6 : vector<128x128xf32>
    %9 = math.exp %8 : vector<128x128xf32>
    %cst_6 = arith.constant 0.000000e+00 : f32
    %10 = vector.broadcast %cst_6 : f32 to vector<128x128xf32>
    %11 = arith.maximumf %5, %10 : vector<128x128xf32>
    %cst_7 = arith.constant 1.000000e+00 : f32
    %12 = vector.broadcast %cst_7 : f32 to vector<128x128xf32>
    %13 = arith.addf %12, %9 : vector<128x128xf32>
    %14 = math.log %13 : vector<128x128xf32>
    %15 = arith.addf %11, %14 : vector<128x128xf32>
    %cst_8 = arith.constant dense<0.000000e+00> : vector<128xf32>
    %16 = vector.multi_reduction <add>, %15, %cst_8 [1] : vector<128x128xf32> to vector<128xf32>
    %17 = vector.shape_cast %16 : vector<128xf32> to vector<128x1xf32>
    %18 = vector.shape_cast %0 : vector<128x32xbf16> to vector<1x128x32xbf16>
    %19 = arith.extf %18 : vector<1x128x32xbf16> to vector<1x128x32xf32>
    %c0_9 = arith.constant 0 : index
    %c0_10 = arith.constant 0 : index
    %20 = vector.load %arg3[%c0_9, %c0_10] : memref<128x32xbf16, #tpu.memory_space<vmem>>, vector<128x32xbf16>
    %21 = vector.shape_cast %20 : vector<128x32xbf16> to vector<1x128x32xbf16>
    %22 = arith.extf %21 : vector<1x128x32xbf16> to vector<1x128x32xf32>
    %23 = arith.mulf %19, %22 : vector<1x128x32xf32>
    %cst_11 = arith.constant dense<0.000000e+00> : vector<1x128xf32>
    %24 = vector.multi_reduction <add>, %23, %cst_11 [2] : vector<1x128x32xf32> to vector<1x128xf32>
    %c0_12 = arith.constant 0 : index
    %c0_13 = arith.constant 0 : index
    %c0_14 = arith.constant 0 : index
    %25 = vector.load %arg4[%c0_12, %c0_13, %c0_14] : memref<1x1x128xf32, #tpu.memory_space<vmem>>, vector<1x1x128xf32>
    %26 = vector.shape_cast %25 : vector<1x1x128xf32> to vector<1x128xf32>
    %27 = arith.addf %24, %26 : vector<1x128xf32>
    %28 = math.absf %27 : vector<1x128xf32>
    %cst_15 = arith.constant 0.000000e+00 : f32
    %29 = vector.broadcast %cst_15 : f32 to vector<1x128xf32>
    %30 = arith.subf %29, %28 : vector<1x128xf32>
    %31 = math.exp %30 : vector<1x128xf32>
    %cst_16 = arith.constant 0.000000e+00 : f32
    %32 = vector.broadcast %cst_16 : f32 to vector<1x128xf32>
    %33 = arith.subf %32, %27 : vector<1x128xf32>
    %cst_17 = arith.constant 0.000000e+00 : f32
    %34 = vector.broadcast %cst_17 : f32 to vector<1x128xf32>
    %35 = arith.maximumf %33, %34 : vector<1x128xf32>
    %cst_18 = arith.constant 1.000000e+00 : f32
    %36 = vector.broadcast %cst_18 : f32 to vector<1x128xf32>
    %37 = arith.addf %36, %31 : vector<1x128xf32>
    %38 = math.log %37 : vector<1x128xf32>
    %39 = arith.addf %35, %38 : vector<1x128xf32>
    %c128_i32 = arith.constant 128 : i32
    %40 = arith.muli %arg0, %c128_i32 : i32
    %41 = tpu.iota {dimensions = array<i32: 0>} : vector<1x128xi32>
    %c128_i32_19 = arith.constant 128 : i32
    %42 = vector.broadcast %c128_i32_19 : i32 to vector<1x128xi32>
    %43 = arith.muli %42, %41 : vector<1x128xi32>
    %44 = vector.broadcast %40 : i32 to vector<1x128xi32>
    %45 = arith.addi %44, %43 : vector<1x128xi32>
    %46 = tpu.iota {dimensions = array<i32: 1>} : vector<1x128xi32>
    %47 = arith.addi %45, %46 : vector<1x128xi32>
    %48 = tpu.iota {dimensions = array<i32: 0>} : vector<128x1xi32>
    %49 = vector.broadcast %40 : i32 to vector<128x1xi32>
    %50 = arith.addi %49, %48 : vector<128x1xi32>
    %c192_i32 = arith.constant 192 : i32
    %51 = vector.broadcast %c192_i32 : i32 to vector<1x128xi32>
    %52 = arith.cmpi slt, %47, %51 : vector<1x128xi32>
    %cst_20 = arith.constant 0.000000e+00 : f32
    %53 = vector.broadcast %cst_20 : f32 to vector<1x128xf32>
    %54 = arith.select %52, %39, %53 : vector<1x128xi1>, vector<1x128xf32>
    %55 = vector.shape_cast %54 : vector<1x128xf32> to vector<1x1x128xf32>
    %cst_21 = arith.constant dense<0.000000e+00> : vector<1xf32>
    %56 = vector.multi_reduction <add>, %55, %cst_21 [1, 2] : vector<1x1x128xf32> to vector<1xf32>
    %57 = vector.shape_cast %56 : vector<1xf32> to vector<1x1x1xf32>
    %58 = vector.extract %57[0, 0, 0] : f32 from vector<1x1x1xf32>
    %c192_i32_22 = arith.constant 192 : i32
    %59 = vector.broadcast %c192_i32_22 : i32 to vector<128x1xi32>
    %60 = arith.cmpi slt, %50, %59 : vector<128x1xi32>
    %cst_23 = arith.constant 0.000000e+00 : f32
    %61 = vector.broadcast %cst_23 : f32 to vector<128x1xf32>
    %62 = arith.select %60, %17, %61 : vector<128x1xi1>, vector<128x1xf32>
    %63 = vector.shape_cast %62 : vector<128x1xf32> to vector<1x128x1xf32>
    %cst_24 = arith.constant dense<0.000000e+00> : vector<1xf32>
    %64 = vector.multi_reduction <add>, %63, %cst_24 [1, 2] : vector<1x128x1xf32> to vector<1xf32>
    %65 = vector.shape_cast %64 : vector<1xf32> to vector<1x1x1xf32>
    %66 = vector.extract %65[0, 0, 0] : f32 from vector<1x1x1xf32>
    %67 = arith.addf %58, %66 : f32
    %68 = vector.broadcast %67 : f32 to vector<1x8x128xf32>
    %c0_25 = arith.constant 0 : index
    %c0_26 = arith.constant 0 : index
    %c0_27 = arith.constant 0 : index
    %69 = vector.load %arg6[%c0_25, %c0_26, %c0_27] : memref<1x8x128xf32, #tpu.memory_space<vmem>>, vector<1x8x128xf32>
    tpu.vector_store %arg6[%c0_25, %c0_26, %c0_27], %68 {strides = array<i32>} : memref<1x8x128xf32, #tpu.memory_space<vmem>>, vector<1x8x128xf32>,
    return
  }
  func.func @transform_0(%arg0: i32) -> (i32, i32) {
    %c0_i32 = arith.constant 0 : i32
    %c0_i32_0 = arith.constant 0 : i32
    return %arg0, %c0_i32 : i32, i32
  }
  func.func @transform_1(%arg0: i32) -> (i32, i32) {
    %c0_i32 = arith.constant 0 : i32
    %c0_i32_0 = arith.constant 0 : i32
    %c0_i32_1 = arith.constant 0 : i32
    return %c0_i32, %c0_i32_0 : i32, i32
  }
  func.func @transform_2(%arg0: i32) -> (i32, i32) {
    %c0_i32 = arith.constant 0 : i32
    %c0_i32_0 = arith.constant 0 : i32
    return %arg0, %c0_i32 : i32, i32
  }
  func.func @transform_3(%arg0: i32) -> (i32, i32, i32) {
    %c0_i32 = arith.constant 0 : i32
    %c0_i32_0 = arith.constant 0 : i32
    %c0_i32_1 = arith.constant 0 : i32
    return %arg0, %c0_i32, %c0_i32_0 : i32, i32, i32
  }
  func.func @transform_4(%arg0: i32) -> (i32, i32) {
    %c0_i32 = arith.constant 0 : i32
    %c0_i32_0 = arith.constant 0 : i32
    %c0_i32_1 = arith.constant 0 : i32
    return %c0_i32, %c0_i32_0 : i32, i32
  }
  func.func @transform_5(%arg0: i32) -> (i32, i32, i32) {
    %c0_i32 = arith.constant 0 : i32
    %c0_i32_0 = arith.constant 0 : i32
    %c0_i32_1 = arith.constant 0 : i32
    return %arg0, %c0_i32, %c0_i32_0 : i32, i32, i32
  }
}

</mosaic_0001>

<llo_original>
// kernel: tpu_custom_call.1
$region0: #{tpu_custom_call.1}
  #allocation0 [shape = 'u32[]', space=smem, size = 0x4, offset = 0x4, fixed_abs, tag = 'smem constant byte address 0x4 - core index']
  #allocation1 [shape = 'u32[144,128]{1,0:T(1,128)}', space=vmem, size = 0x12000, scoped, tag = 'internal scratch']
  %s0 = inlined_call_operand.hbm [shape: bf16[192,32], index: 0, kind: input, shape index: {}]
  %s1 = inlined_call_operand.hbm [shape: bf16[32,128], index: 1, kind: input, shape index: {}]
  %s2 = inlined_call_operand.hbm [shape: bf16[192,32], index: 2, kind: input, shape index: {}]
  %s3 = inlined_call_operand.hbm [shape: f32[2,1,128], index: 3, kind: input, shape index: {}]
  %s4 = inlined_call_operand.hbm [shape: f32[1,128], index: 4, kind: input, shape index: {}]
  %s5 = inlined_call_operand.hbm [shape: f32[2,8,128], index: 5, kind: output, shape index: {}]
  %s6 = sld [smem:[#allocation0]]
  $region73: #{tpu_custom_call.1} parent=0
    _
  %s8 = ssub.s32 1, %s6
  %s9 = scalar_select 0, %s8, %s6
  $region1: #{tpu_custom_call.1} parent=0
    #allocation2 [shape = 'u8[65536]{0}', space=vmem, size = 0x10000, scoped, tag = 'input window, operand 0']
    #allocation3 [shape = 's32[2]{0}', space=sflag, size = 0x8, scoped, tag = 'scoped memory for tpu_custom_call.1']
    #allocation4 [shape = 's32[2]{0}', space=sflag, size = 0x8, scoped, tag = 'scoped memory for tpu_custom_call.1']
    #allocation5 [shape = 'u8[8192]{0}', space=vmem, size = 0x2000, scoped, tag = 'input window, operand 1, single buffered']
    #allocation6 [shape = 's32[1]{0}', space=sflag, size = 0x4, scoped, tag = 'scoped memory for tpu_custom_call.1']
    #allocation7 [shape = 'u8[65536]{0}', space=vmem, size = 0x10000, scoped, tag = 'input window, operand 2']
    #allocation8 [shape = 'u8[1024]{0}', space=vmem, size = 0x400, scoped, tag = 'input window, operand 3']
    #allocation9 [shape = 'u8[512]{0}', space=vmem, size = 0x400, scoped, tag = 'input window, operand 4, single buffered']
    #allocation10 [shape = 'u8[8192]{0}', space=vmem, size = 0x2000, scoped, tag = 'output window, operand 0']
    %10 = vsyncpa [#allocation3], 0
    %s11 = scalar_lea.sflag [#allocation3], 1
    %12 = vsyncpa %s11, 0
    %13 = vsyncpa [#allocation6], 0
    %14 = vsyncpa [#allocation4], 0
    %s15 = scalar_lea.sflag [#allocation4], 1
    %16 = vsyncpa %s15, 0
    loop: start=0, step=1, limit=4
    $region2: #{tpu_custom_call.1} parent=1 // loop_pre_header
      _
    $region3: #{tpu_custom_call.1} parent=1 // loop_header
      %s18 = sphi 0, %s22
      %p19 = scmp.ge.s32.totalorder %s18, 4
      %s28 = sphi 0, %s30
      %s31 = sphi 0, %s28
      %s32 = sphi 0, %s31
      %s48 = sphi 0, %s32
      %s52 = sphi 0, %s52
      %s54 = sphi 0, %s52
      %s55 = sphi 0, %s54
      %s69 = sphi 0, %s55
      %s75 = sphi 0, %s77
      %s78 = sphi 0, %s75
      %s79 = sphi 0, %s78
      %s95 = sphi 0, %s79
      %s101 = sphi 0, %s103
      %s104 = sphi 0, %s101
      %s105 = sphi 0, %s104
      %s121 = sphi 0, %s105
      %s125 = sphi 0, %s125
      %s127 = sphi 0, %s125
      %s128 = sphi 0, %s127
      %s142 = sphi 0, %s128
      %s148 = sphi 0, %s150
      %s151 = sphi 0, %s148
      %s152 = sphi 0, %s151
      %s168 = sphi 0, %s152
    $region4: #{tpu_custom_call.1} parent=1 // loop_header_branch
      %21 = sbr.rel (%p19) target = $region8
    $region5: #{tpu_custom_call.1} parent=1 // loop_body
      %s23 = ssub.s32 %s18, 1
      %s24 = ssub.s32 %s18, 2
      %s25 = sadd.s32 %s18, 1
      %s26 = ssub.s32 %s18, %s25
      %p27 = scmp.eq.s32.totalorder %s26, 0
      %s29 = sadd.s32 %s28, 1
      %s30 = scalar_select %p27, %s28, %s29
      %p33 = pneg %p27
      %p34 = scmp.eq.s32.totalorder %s18, 1
      %p35 = por %p33, %p34
      %p36 = scmp.ne.s32.totalorder %s28, %s31
      %p37 = scmp.eq.s32.totalorder %s18, 0
      %p38 = por %p36, %p37
      %p39 = scmp.ne.s32.totalorder %s28, %s31
      %p40 = scmp.eq.s32.totalorder %s23, 1
      %p41 = por %p39, %p40
      %p42 = scmp.ne.s32.totalorder %s31, %s32
      %p43 = scmp.eq.s32.totalorder %s23, 0
      %p44 = por %p42, %p43
      %p45 = scmp.ne.s32.totalorder %s31, %s32
      %p46 = scmp.eq.s32.totalorder %s24, 1
      %p47 = por %p45, %p46
      %p49 = scmp.ne.s32.totalorder %s32, %s48
      %p50 = scmp.eq.s32.totalorder %s24, 0
      %p51 = por %p49, %p50
      %s53 = sadd.s32 %s52, 1
      %p56 = scmp.eq.s32.totalorder %s18, 1
      %p57 = scmp.ne.s32.totalorder %s52, %s54
      %p58 = scmp.eq.s32.totalorder %s18, 0
      %p59 = por %p57, %p58
      %p60 = scmp.ne.s32.totalorder %s52, %s54
      %p61 = scmp.eq.s32.totalorder %s23, 1
      %p62 = por %p60, %p61
      %p63 = scmp.ne.s32.totalorder %s54, %s55
      %p64 = scmp.eq.s32.totalorder %s23, 0
      %p65 = por %p63, %p64
      %p66 = scmp.ne.s32.totalorder %s54, %s55
      %p67 = scmp.eq.s32.totalorder %s24, 1
      %p68 = por %p66, %p67
      %p70 = scmp.ne.s32.totalorder %s55, %s69
      %p71 = scmp.eq.s32.totalorder %s24, 0
      %p72 = por %p70, %p71
      %s73 = ssub.s32 %s18, %s25
      %p74 = scmp.eq.s32.totalorder %s73, 0
      %s76 = sadd.s32 %s75, 1
      %s77 = scalar_select %p74, %s75, %s76
      %p80 = pneg %p74
      %p81 = scmp.eq.s32.totalorder %s18, 1
      %p82 = por %p80, %p81
      %p83 = scmp.ne.s32.totalorder %s75, %s78
      %p84 = scmp.eq.s32.totalorder %s18, 0
      %p85 = por %p83, %p84
      %p86 = scmp.ne.s32.totalorder %s75, %s78
      %p87 = scmp.eq.s32.totalorder %s23, 1
      %p88 = por %p86, %p87
      %p89 = scmp.ne.s32.totalorder %s78, %s79
      %p90 = scmp.eq.s32.totalorder %s23, 0
      %p91 = por %p89, %p90
      %p92 = scmp.ne.s32.totalorder %s78, %s79
      %p93 = scmp.eq.s32.totalorder %s24, 1
      %p94 = por %p92, %p93
      %p96 = scmp.ne.s32.totalorder %s79, %s95
      %p97 = scmp.eq.s32.totalorder %s24, 0
      %p98 = por %p96, %p97
      %s99 = ssub.s32 %s18, %s25
      %p100 = scmp.eq.s32.totalorder %s99, 0
      %s102 = sadd.s32 %s101, 1
      %s103 = scalar_select %p100, %s101, %s102
      %p106 = pneg %p100
      %p107 = scmp.eq.s32.totalorder %s18, 1
      %p108 = por %p106, %p107
      %p109 = scmp.ne.s32.totalorder %s101, %s104
      %p110 = scmp.eq.s32.totalorder %s18, 0
      %p111 = por %p109, %p110
      %p112 = scmp.ne.s32.totalorder %s101, %s104
      %p113 = scmp.eq.s32.totalorder %s23, 1
      %p114 = por %p112, %p113
      %p115 = scmp.ne.s32.totalorder %s104, %s105
      %p116 = scmp.eq.s32.totalorder %s23, 0
      %p117 = por %p115, %p116
      %p118 = scmp.ne.s32.totalorder %s104, %s105
      %p119 = scmp.eq.s32.totalorder %s24, 1
      %p120 = por %p118, %p119
      %p122 = scmp.ne.s32.totalorder %s105, %s121
      %p123 = scmp.eq.s32.totalorder %s24, 0
      %p124 = por %p122, %p123
      %s126 = sadd.s32 %s125, 1
      %p129 = scmp.eq.s32.totalorder %s18, 1
      %p130 = scmp.ne.s32.totalorder %s125, %s127
      %p131 = scmp.eq.s32.totalorder %s18, 0
      %p132 = por %p130, %p131
      %p133 = scmp.ne.s32.totalorder %s125, %s127
      %p134 = scmp.eq.s32.totalorder %s23, 1
      %p135 = por %p133, %p134
      %p136 = scmp.ne.s32.totalorder %s127, %s128
      %p137 = scmp.eq.s32.totalorder %s23, 0
      %p138 = por %p136, %p137
      %p139 = scmp.ne.s32.totalorder %s127, %s128
      %p140 = scmp.eq.s32.totalorder %s24, 1
      %p141 = por %p139, %p140
      %p143 = scmp.ne.s32.totalorder %s128, %s142
      %p144 = scmp.eq.s32.totalorder %s24, 0
      %p145 = por %p143, %p144
      %s146 = ssub.s32 %s18, %s25
      %p147 = scmp.eq.s32.totalorder %s146, 0
      %s149 = sadd.s32 %s148, 1
      %s150 = scalar_select %p147, %s148, %s149
      %p153 = pneg %p147
      %p154 = scmp.eq.s32.totalorder %s18, 1
      %p155 = por %p153, %p154
      %p156 = scmp.ne.s32.totalorder %s148, %s151
      %p157 = scmp.eq.s32.totalorder %s18, 0
      %p158 = por %p156, %p157
      %p159 = scmp.ne.s32.totalorder %s148, %s151
      %p160 = scmp.eq.s32.totalorder %s23, 1
      %p161 = por %p159, %p160
      %p162 = scmp.ne.s32.totalorder %s151, %s152
      %p163 = scmp.eq.s32.totalorder %s23, 0
      %p164 = por %p162, %p163
      %p165 = scmp.ne.s32.totalorder %s151, %s152
      %p166 = scmp.eq.s32.totalorder %s24, 1
      %p167 = por %p165, %p166
      %p169 = scmp.ne.s32.totalorder %s152, %s168
      %p170 = scmp.eq.s32.totalorder %s24, 0
      %p171 = por %p169, %p170
      %p172 = scmp.le.s32.totalorder 1, %s18
      %p173 = scmp.lt.s32.totalorder %s18, 3
      %p174 = pnand %p172, %p173
      %p175 = pneg %p174
      // Predicated region
      $region9: #{tpu_custom_call.1} parent=5 // pred_check
        _
      $region10: #{tpu_custom_call.1} parent=5 // pred_check_branch
        %177 = sbr.rel (%p174) target = $region12
      $region11: #{tpu_custom_call.1} parent=5 // pred_region
        %s178 = ssub.s32 %s18, 1
        // Predicated region
        $region13: #{tpu_custom_call.1} parent=11 // pred_check
          %p179 = pneg %p65
        $region14: #{tpu_custom_call.1} parent=11 // pred_check_branch
          %181 = sbr.rel (%p179) target = $region16
        $region15: #{tpu_custom_call.1} parent=11 // pred_region
          %s183 = ssub.s32 256, 256
          %184 = vsyncadd [#allocation6], %s183
          %s185 = sshll.u32 [#allocation5], 4
          %s186 = int_to_ptr.vmem [resolvable:$true] %s185
          %191 = dma.hbm_to_vmem [thread:$0]  %s1, 256, %s186, [#allocation6], 64, 64, 4
        $region16: #{tpu_custom_call.1} parent=11 // pred_fallthru
          _
        // Predicated region
        $region17: #{tpu_custom_call.1} parent=11 // pred_check
          %p192 = pneg %p138
        $region18: #{tpu_custom_call.1} parent=11 // pred_check_branch
          %194 = sbr.rel (%p192) target = $region20
        $region19: #{tpu_custom_call.1} parent=11 // pred_region
          %s196 = ssub.s32 16, 16
          %197 = vsyncadd [#allocation6], %s196
          %s199 = sshll.u32 [#allocation9], 4
          %s200 = int_to_ptr.vmem [resolvable:$true] %s199
          %202 = dma.hbm_to_vmem [thread:$0]  %s4, 16, %s200, [#allocation6]
        $region20: #{tpu_custom_call.1} parent=11 // pred_fallthru
          _
      $region12: #{tpu_custom_call.1} parent=5 // pred_fallthru
        _
      %p203 = scmp.lt.s32.totalorder %s18, 2
      // Predicated region
      $region21: #{tpu_custom_call.1} parent=5 // pred_check
        %p204 = pneg %p203
      $region22: #{tpu_custom_call.1} parent=5 // pred_check_branch
        %206 = sbr.rel (%p204) target = $region24
      $region23: #{tpu_custom_call.1} parent=5 // pred_region
        // Predicated region
        $region25: #{tpu_custom_call.1} parent=23 // pred_check
          %p207 = pneg %p38
        $region26: #{tpu_custom_call.1} parent=23 // pred_check_branch
          %209 = sbr.rel (%p207) target = $region28
        $region27: #{tpu_custom_call.1} parent=23 // pred_region
          %s210 = sand.u32 %s18, 1
          %s211 = scalar_lea.sflag [#allocation3], %s210
          %s212 = sand.u32 %s28, 1
          %s213 = smul.addr %s212, 64
          %s214 = scalar_lea.vmem [#allocation2], %s213
          %s215 = smul.u32 16, %s18
          %s216 = ssub.s32 24, %s215
          %p217 = scmp.lt.s32.totalorder %s216, 16
          %s218 = scalar_select %p217, %s216, 16
          %s219 = smul.u32 64, %s218
          %s221 = ssub.s32 1024, %s219
          %222 = vsyncadd %s211, %s221
          %p223 = scmp.ne.s32.totalorder 0, %s219
          %s224 = smul.addr %s215, 64
          %s225 = scalar_lea.hbm %s0, %s224
          %s226 = smul.u32 4, %s218
          %s227 = sshll.u32 %s214, 4
          %s228 = int_to_ptr.vmem [resolvable:$true] %s227
          %s229 = sshll.u32 %s226, 4
          %233 = dma.hbm_to_vmem [thread:$0]  (%p223), %s225, %s229, %s228, %s211, 64, 64, 4
        $region28: #{tpu_custom_call.1} parent=23 // pred_fallthru
          _
        // Predicated region
        $region29: #{tpu_custom_call.1} parent=23 // pred_check
          %p234 = pneg %p85
        $region30: #{tpu_custom_call.1} parent=23 // pred_check_branch
          %236 = sbr.rel (%p234) target = $region32
        $region31: #{tpu_custom_call.1} parent=23 // pred_region
          %s237 = sand.u32 %s18, 1
          %s238 = scalar_lea.sflag [#allocation3], %s237
          %s239 = sand.u32 %s75, 1
          %s240 = smul.addr %s239, 64
          %s241 = scalar_lea.vmem [#allocation7], %s240
          %s242 = smul.u32 16, %s18
          %s243 = ssub.s32 24, %s242
          %p244 = scmp.lt.s32.totalorder %s243, 16
          %s245 = scalar_select %p244, %s243, 16
          %s246 = smul.u32 64, %s245
          %s248 = ssub.s32 1024, %s246
          %249 = vsyncadd %s238, %s248
          %p250 = scmp.ne.s32.totalorder 0, %s246
          %s251 = smul.addr %s242, 64
          %s252 = scalar_lea.hbm %s2, %s251
          %s253 = smul.u32 4, %s245
          %s254 = sshll.u32 %s241, 4
          %s255 = int_to_ptr.vmem [resolvable:$true] %s254
          %s256 = sshll.u32 %s253, 4
          %260 = dma.hbm_to_vmem [thread:$0]  (%p250), %s252, %s256, %s255, %s238, 64, 64, 4
        $region32: #{tpu_custom_call.1} parent=23 // pred_fallthru
          _
        // Predicated region
        $region33: #{tpu_custom_call.1} parent=23 // pred_check
          %p261 = pneg %p111
        $region34: #{tpu_custom_call.1} parent=23 // pred_check_branch
          %263 = sbr.rel (%p261) target = $region36
        $region35: #{tpu_custom_call.1} parent=23 // pred_region
          %s264 = sand.u32 %s18, 1
          %s265 = scalar_lea.sflag [#allocation3], %s264
          %s266 = sand.u32 %s101, 1
          %s267 = scalar_lea.vmem [#allocation8], %s266
          %s269 = ssub.s32 16, 16
          %270 = vsyncadd %s265, %s269
          %s271 = smul.addr %s18, 16
          %s272 = scalar_lea.hbm %s3, %s271
          %s274 = sshll.u32 %s267, 4
          %s275 = int_to_ptr.vmem [resolvable:$true] %s274
          %277 = dma.hbm_to_vmem [thread:$0]  %s272, 16, %s275, %s265
        $region36: #{tpu_custom_call.1} parent=23 // pred_fallthru
          _
      $region24: #{tpu_custom_call.1} parent=5 // pred_fallthru
        _
      %p278 = scmp.le.s32.totalorder 1, %s18
      %p279 = scmp.lt.s32.totalorder %s18, 3
      %p280 = pnand %p278, %p279
      %p281 = pneg %p280
      // Predicated region
      $region37: #{tpu_custom_call.1} parent=5 // pred_check
        _
      $region38: #{tpu_custom_call.1} parent=5 // pred_check_branch
        %283 = sbr.rel (%p280) target = $region40
      $region39: #{tpu_custom_call.1} parent=5 // pred_region
        %s284 = ssub.s32 %s18, 1
        %s285 = sand.u32 %s23, 1
        %s286 = scalar_lea.sflag [#allocation3], %s285
        %s287 = sand.u32 %s31, 1
        %s288 = smul.addr %s287, 64
        %s289 = scalar_lea.vmem [#allocation2], %s288
        // Predicated region
        $region41: #{tpu_custom_call.1} parent=39 // pred_check
          %p290 = pneg %p44
        $region42: #{tpu_custom_call.1} parent=39 // pred_check_branch
          %292 = sbr.rel (%p290) target = $region44
        $region43: #{tpu_custom_call.1} parent=39 // pred_region
          %293 = dma.done %s286, 1024
        $region44: #{tpu_custom_call.1} parent=39 // pred_fallthru
          _
        // Predicated region
        $region45: #{tpu_custom_call.1} parent=39 // pred_check
          %p294 = pneg %p65
        $region46: #{tpu_custom_call.1} parent=39 // pred_check_branch
          %296 = sbr.rel (%p294) target = $region48
        $region47: #{tpu_custom_call.1} parent=39 // pred_region
          %297 = dma.done [#allocation6], 256
        $region48: #{tpu_custom_call.1} parent=39 // pred_fallthru
          _
        %s298 = sand.u32 %s23, 1
        %s299 = scalar_lea.sflag [#allocation3], %s298
        %s300 = sand.u32 %s78, 1
        %s301 = smul.addr %s300, 64
        %s302 = scalar_lea.vmem [#allocation7], %s301
        // Predicated region
        $region49: #{tpu_custom_call.1} parent=39 // pred_check
          %p303 = pneg %p91
        $region50: #{tpu_custom_call.1} parent=39 // pred_check_branch
          %305 = sbr.rel (%p303) target = $region52
        $region51: #{tpu_custom_call.1} parent=39 // pred_region
          %306 = dma.done %s299, 1024
        $region52: #{tpu_custom_call.1} parent=39 // pred_fallthru
          _
        %s307 = sand.u32 %s23, 1
        %s308 = scalar_lea.sflag [#allocation3], %s307
        %s309 = sand.u32 %s104, 1
        %s310 = scalar_lea.vmem [#allocation8], %s309
        // Predicated region
        $region53: #{tpu_custom_call.1} parent=39 // pred_check
          %p311 = pneg %p117
        $region54: #{tpu_custom_call.1} parent=39 // pred_check_branch
          %313 = sbr.rel (%p311) target = $region56
        $region55: #{tpu_custom_call.1} parent=39 // pred_region
          %314 = dma.done %s308, 16
        $region56: #{tpu_custom_call.1} parent=39 // pred_fallthru
          _
        // Predicated region
        $region57: #{tpu_custom_call.1} parent=39 // pred_check
          %p315 = pneg %p138
        $region58: #{tpu_custom_call.1} parent=39 // pred_check_branch
          %317 = sbr.rel (%p315) target = $region60
        $region59: #{tpu_custom_call.1} parent=39 // pred_region
          %318 = dma.done [#allocation6], 16
        $region60: #{tpu_custom_call.1} parent=39 // pred_fallthru
          _
        %s319 = sand.u32 %s23, 1
        %s320 = scalar_lea.sflag [#allocation3], %s319
        %s321 = sand.u32 %s31, 1
        %s322 = smul.addr %s321, 64
        %s323 = scalar_lea.vmem [#allocation2], %s322
        %p324 = pneg %p44
        %p325 = pneg %p41
        %p326 = pneg %p65
        %p327 = pneg %p62
        %s328 = sand.u32 %s23, 1
        %s329 = scalar_lea.sflag [#allocation3], %s328
        %s330 = sand.u32 %s78, 1
        %s331 = smul.addr %s330, 64
        %s332 = scalar_lea.vmem [#allocation7], %s331
        %p333 = pneg %p91
        %p334 = pneg %p88
        %s335 = sand.u32 %s23, 1
        %s336 = scalar_lea.sflag [#allocation3], %s335
        %s337 = sand.u32 %s104, 1
        %s338 = scalar_lea.vmem [#allocation8], %s337
        %p339 = pneg %p117
        %p340 = pneg %p114
        %p341 = pneg %p138
        %p342 = pneg %p135
        %p343 = pneg %p164
        %p344 = pneg %p161
        %s345 = sand.u32 %s151, 1
        %s346 = scalar_lea.sflag [#allocation4], %s345
        %s347 = sand.u32 %s151, 1
        %s348 = smul.addr %s347, 8
        %s349 = scalar_lea.vmem [#allocation10], %s348
        %s350 = smul.u32 16, %s23
        %s351 = ssub.s32 24, %s350
        %p352 = scmp.lt.s32.totalorder %s351, 16
        %s353 = scalar_select %p352, %s351, 16
        %s354 = smul.u32 64, %s353
        %s355 = smul.u32 16, %s23
        %s356 = ssub.s32 24, %s355
        %p357 = scmp.lt.s32.totalorder %s356, 16
        %s358 = scalar_select %p357, %s356, 16
        %s359 = smul.u32 64, %s358
        %v361 = vld [vmem:[%s289] sm:$0xf]
        %v362 = vld [vmem:[%s289 + $0x4] sm:$0xf]
        %v363 = vld [vmem:[%s289 + $0x8] sm:$0xf]
        %v364 = vld [vmem:[%s289 + $0xc] sm:$0xf]
        %v365 = vld [vmem:[%s289 + $0x10] sm:$0xf]
        %v366 = vld [vmem:[%s289 + $0x14] sm:$0xf]
        %v367 = vld [vmem:[%s289 + $0x18] sm:$0xf]
        %v368 = vld [vmem:[%s289 + $0x1c] sm:$0xf]
        %v369 = vld [vmem:[%s289 + $0x20] sm:$0xf]
        %v370 = vld [vmem:[%s289 + $0x24] sm:$0xf]
        %v371 = vld [vmem:[%s289 + $0x28] sm:$0xf]
        %v372 = vld [vmem:[%s289 + $0x2c] sm:$0xf]
        %v373 = vld [vmem:[%s289 + $0x30] sm:$0xf]
        %v374 = vld [vmem:[%s289 + $0x34] sm:$0xf]
        %v375 = vld [vmem:[%s289 + $0x38] sm:$0xf]
        %v376 = vld [vmem:[%s289 + $0x3c] sm:$0xf]
        %v377 = vld [vmem:[#allocation5] sm:$0xf]
        %v378 = vld [vmem:[#allocation5 + $0x4] sm:$0xf]
        %v379 = vld [vmem:[#allocation5 + $0x8] sm:$0xf]
        %v380 = vld [vmem:[#allocation5 + $0xc] sm:$0xf]
        %v381 = vld [vmem:[#allocation9] sm:$0x1]
        %v383 = vlaneseq
        %v384 = vshrl.u32 %v383, 7
        %v385 = vsub.s32 0, %v384
        %v386 = vrot.slane %v381, %v385
        %v404 = vunpack.c.l.b16 %v361
        %v405 = vunpack.c.l.b16 %v362
        %v406 = vunpack.c.l.b16 %v363
        %v407 = vunpack.c.l.b16 %v364
        %v408 = vunpack.c.l.b16 %v365
        %v409 = vunpack.c.l.b16 %v366
        %v410 = vunpack.c.l.b16 %v367
        %v411 = vunpack.c.l.b16 %v368
        %v412 = vunpack.c.l.b16 %v369
        %v413 = vunpack.c.l.b16 %v370
        %v414 = vunpack.c.l.b16 %v371
        %v415 = vunpack.c.l.b16 %v372
        %v416 = vunpack.c.l.b16 %v373
        %v417 = vunpack.c.l.b16 %v374
        %v418 = vunpack.c.l.b16 %v375
        %v419 = vunpack.c.l.b16 %v376
        %v420 = vpack.c.b16 %v405, %v404
        %v421 = vpack.c.b16 %v407, %v406
        %v422 = vpack.c.b16 %v409, %v408
        %v423 = vpack.c.b16 %v411, %v410
        %v424 = vpack.c.b16 %v413, %v412
        %v425 = vpack.c.b16 %v415, %v414
        %v426 = vpack.c.b16 %v417, %v416
        %v427 = vpack.c.b16 %v419, %v418
        %v432 = vunpack.c.l.b16 %v377
        %v433 = vunpack.c.l.b16 %v378
        %v434 = vunpack.c.l.b16 %v379
        %v435 = vunpack.c.l.b16 %v380
        %v436 = vpack.c.b16 %v433, %v432
        %v437 = vpack.c.b16 %v435, %v434
        %vm440 = vcmask 261120
        %v442 = vsel %vm440, %v420, 0
        %v445 = vsel %vm440, %v421, 0
        %v448 = vsel %vm440, %v422, 0
        %v451 = vsel %vm440, %v423, 0
        %v454 = vsel %vm440, %v424, 0
        %v457 = vsel %vm440, %v425, 0
        %v460 = vsel %vm440, %v426, 0
        %v463 = vsel %vm440, %v427, 0
        %465 = vmatprep.subr.bf16.mxu0 0
        %466 = vmatpush1.bf16.msra.mxu0 %v436
        %467 = vmatprep.subr.bf16.mxu0 0
        %468 = vmatpush1.bf16.msra.mxu0 %v437
        %469 = vmatprep.subr.bf16.mxu0 0
        %470 = vmatpush1.bf16.msra.mxu0 0
        %471 = vmatprep.subr.bf16.mxu0 0
        %472 = vmatpush1.bf16.msra.mxu0 0
        %473 = vmatprep.subr.bf16.mxu0 0
        %474 = vmatpush1.bf16.msra.mxu0 0
        %475 = vmatprep.subr.bf16.mxu0 0
        %476 = vmatpush1.bf16.msra.mxu0 0
        %477 = vmatprep.subr.bf16.mxu0 0
        %478 = vmatpush1.bf16.msra.mxu0 0
        %479 = vmatprep.subr.bf16.mxu0 0
        %480 = vmatpush1.bf16.msra.mxu0 0
        %481 = vmatprep.subr.bf16.mxu0 0
        %482 = vmatpush1.bf16.msra.mxu0 0
        %483 = vmatprep.subr.bf16.mxu0 0
        %484 = vmatpush1.bf16.msra.mxu0 0
        %485 = vmatprep.subr.bf16.mxu0 0
        %486 = vmatpush1.bf16.msra.mxu0 0
        %487 = vmatprep.subr.bf16.mxu0 0
        %488 = vmatpush1.bf16.msra.mxu0 0
        %489 = vmatprep.subr.bf16.mxu0 0
        %490 = vmatpush1.bf16.msra.mxu0 0
        %491 = vmatprep.subr.bf16.mxu0 0
        %492 = vmatpush1.bf16.msra.mxu0 0
        %493 = vmatprep.subr.bf16.mxu0 0
        %494 = vmatpush1.bf16.msra.mxu0 0
        %495 = vmatprep.subr.bf16.mxu0 0
        %496 = vmatpush1.bf16.msra.mxu0 0
        %497 = vmatprep.mubr.bf16.mxu0 0
        %498 = vmatmul.mubr.bf16.gmra.mrb[0].mxu0 %v442
        %v499 = vpop.f32.mrb[0].mxu0
        %v500 = vadd.f32 %v386, %v499
        %v501 = vpop.f32.mrb[0].mxu0
        %v502 = vpop.f32.mrb[0].mxu0
        %v503 = vadd.f32 %v386, %v502
        %v504 = vpop.f32.mrb[0].mxu0
        %505 = vmatprep.mubr.bf16.mxu0 0
        %506 = vmatmul.mubr.bf16.gmra.mrb[0].mxu0 %v445
        %v507 = vpop.f32.mrb[0].mxu0
        %v508 = vadd.f32 %v386, %v507
        %v509 = vpop.f32.mrb[0].mxu0
        %v510 = vpop.f32.mrb[0].mxu0
        %v511 = vadd.f32 %v386, %v510
        %v512 = vpop.f32.mrb[0].mxu0
        %513 = vmatprep.mubr.bf16.mxu0 0
        %514 = vmatmul.mubr.bf16.gmra.mrb[0].mxu0 %v448
        %v515 = vpop.f32.mrb[0].mxu0
        %v516 = vadd.f32 %v386, %v515
        %v517 = vpop.f32.mrb[0].mxu0
        %v518 = vpop.f32.mrb[0].mxu0
        %v519 = vadd.f32 %v386, %v518
        %v520 = vpop.f32.mrb[0].mxu0
        %521 = vmatprep.mubr.bf16.mxu0 0
        %522 = vmatmul.mubr.bf16.gmra.mrb[0].mxu0 %v451
        %v523 = vpop.f32.mrb[0].mxu0
        %v524 = vadd.f32 %v386, %v523
        %v525 = vpop.f32.mrb[0].mxu0
        %v526 = vpop.f32.mrb[0].mxu0
        %v527 = vadd.f32 %v386, %v526
        %v528 = vpop.f32.mrb[0].mxu0
        %529 = vmatprep.mubr.bf16.mxu0 0
        %530 = vmatmul.mubr.bf16.gmra.mrb[0].mxu0 %v454
        %v531 = vpop.f32.mrb[0].mxu0
        %v532 = vadd.f32 %v386, %v531
        %v533 = vpop.f32.mrb[0].mxu0
        %v534 = vpop.f32.mrb[0].mxu0
        %v535 = vadd.f32 %v386, %v534
        %v536 = vpop.f32.mrb[0].mxu0
        %537 = vmatprep.mubr.bf16.mxu0 0
        %538 = vmatmul.mubr.bf16.gmra.mrb[0].mxu0 %v457
        %v539 = vpop.f32.mrb[0].mxu0
        %v540 = vadd.f32 %v386, %v539
        %v541 = vpop.f32.mrb[0].mxu0
        %v542 = vpop.f32.mrb[0].mxu0
        %v543 = vadd.f32 %v386, %v542
        %v544 = vpop.f32.mrb[0].mxu0
        %545 = vmatprep.mubr.bf16.mxu0 0
        %546 = vmatmul.mubr.bf16.gmra.mrb[0].mxu0 %v460
        %v547 = vpop.f32.mrb[0].mxu0
        %v548 = vadd.f32 %v386, %v547
        %v549 = vpop.f32.mrb[0].mxu0
        %v550 = vpop.f32.mrb[0].mxu0
        %v551 = vadd.f32 %v386, %v550
        %v552 = vpop.f32.mrb[0].mxu0
        %553 = vmatprep.mubr.bf16.mxu0 0
        %554 = vmatmul.mubr.bf16.gmra.mrb[0].mxu0 %v463
        %v555 = vpop.f32.mrb[0].mxu0
        %v556 = vadd.f32 %v386, %v555
        %v557 = vpop.f32.mrb[0].mxu0
        %v558 = vpop.f32.mrb[0].mxu0
        %v559 = vadd.f32 %v386, %v558
        %v560 = vpop.f32.mrb[0].mxu0
        %561 = vdwg.mxu0
        %v562 = vand.u32 2147483647, %v500
        %v563 = vand.u32 2147483647, %v503
        %v564 = vand.u32 2147483647, %v508
        %v565 = vand.u32 2147483647, %v511
        %v566 = vand.u32 2147483647, %v516
        %v567 = vand.u32 2147483647, %v519
        %v568 = vand.u32 2147483647, %v524
        %v569 = vand.u32 2147483647, %v527
        %v570 = vand.u32 2147483647, %v532
        %v571 = vand.u32 2147483647, %v535
        %v572 = vand.u32 2147483647, %v540
        %v573 = vand.u32 2147483647, %v543
        %v574 = vand.u32 2147483647, %v548
        %v575 = vand.u32 2147483647, %v551
        %v576 = vand.u32 2147483647, %v556
        %v577 = vand.u32 2147483647, %v559
        %v578 = vsub.f32 0.0, %v562
        %v579 = vsub.f32 0.0, %v563
        %v580 = vsub.f32 0.0, %v564
        %v581 = vsub.f32 0.0, %v565
        %v582 = vsub.f32 0.0, %v566
        %v583 = vsub.f32 0.0, %v567
        %v584 = vsub.f32 0.0, %v568
        %v585 = vsub.f32 0.0, %v569
        %v586 = vsub.f32 0.0, %v570
        %v587 = vsub.f32 0.0, %v571
        %v588 = vsub.f32 0.0, %v572
        %v589 = vsub.f32 0.0, %v573
        %v590 = vsub.f32 0.0, %v574
        %v591 = vsub.f32 0.0, %v575
        %v592 = vsub.f32 0.0, %v576
        %v593 = vsub.f32 0.0, %v577
        %v594 = vmul.f32 %v578, 1.442695
        %v595 = vpow.pop %v594
        %v596 = vmul.f32 %v579, 1.442695
        %v597 = vpow.pop %v596
        %v598 = vmul.f32 %v580, 1.442695
        %v599 = vpow.pop %v598
        %v600 = vmul.f32 %v581, 1.442695
        %v601 = vpow.pop %v600
        %v602 = vmul.f32 %v582, 1.442695
        %v603 = vpow.pop %v602
        %v604 = vmul.f32 %v583, 1.442695
        %v605 = vpow.pop %v604
        %v606 = vmul.f32 %v584, 1.442695
        %v607 = vpow.pop %v606
        %v608 = vmul.f32 %v585, 1.442695
        %v609 = vpow.pop %v608
        %v610 = vmul.f32 %v586, 1.442695
        %v611 = vpow.pop %v610
        %v612 = vmul.f32 %v587, 1.442695
        %v613 = vpow.pop %v612
        %v614 = vmul.f32 %v588, 1.442695
        %v615 = vpow.pop %v614
        %v616 = vmul.f32 %v589, 1.442695
        %v617 = vpow.pop %v616
        %v618 = vmul.f32 %v590, 1.442695
        %v619 = vpow.pop %v618
        %v620 = vmul.f32 %v591, 1.442695
        %v621 = vpow.pop %v620
        %v622 = vmul.f32 %v592, 1.442695
        %v623 = vpow.pop %v622
        %v624 = vmul.f32 %v593, 1.442695
        %v625 = vpow.pop %v624
        %v626 = vmax.f32 %v500, 0.0
        %v627 = vmax.f32 %v503, 0.0
        %v628 = vmax.f32 %v508, 0.0
        %v629 = vmax.f32 %v511, 0.0
        %v630 = vmax.f32 %v516, 0.0
        %v631 = vmax.f32 %v519, 0.0
        %v632 = vmax.f32 %v524, 0.0
        %v633 = vmax.f32 %v527, 0.0
        %v634 = vmax.f32 %v532, 0.0
        %v635 = vmax.f32 %v535, 0.0
        %v636 = vmax.f32 %v540, 0.0
        %v637 = vmax.f32 %v543, 0.0
        %v638 = vmax.f32 %v548, 0.0
        %v639 = vmax.f32 %v551, 0.0
        %v640 = vmax.f32 %v556, 0.0
        %v641 = vmax.f32 %v559, 0.0
        %v642 = vadd.f32 %v595, 1.0
        %v643 = vadd.f32 %v597, 1.0
        %v644 = vadd.f32 %v599, 1.0
        %v645 = vadd.f32 %v601, 1.0
        %v646 = vadd.f32 %v603, 1.0
        %v647 = vadd.f32 %v605, 1.0
        %v648 = vadd.f32 %v607, 1.0
        %v649 = vadd.f32 %v609, 1.0
        %v650 = vadd.f32 %v611, 1.0
        %v651 = vadd.f32 %v613, 1.0
        %v652 = vadd.f32 %v615, 1.0
        %v653 = vadd.f32 %v617, 1.0
        %v654 = vadd.f32 %v619, 1.0
        %v655 = vadd.f32 %v621, 1.0
        %v656 = vadd.f32 %v623, 1.0
        %v657 = vadd.f32 %v625, 1.0
        %v658 = vlog2.pop %v642
        %v659 = vmul.f32 %v658, 0.6931472
        %v660 = vlog2.pop %v643
        %v661 = vmul.f32 %v660, 0.6931472
        %v662 = vlog2.pop %v644
        %v663 = vmul.f32 %v662, 0.6931472
        %v664 = vlog2.pop %v645
        %v665 = vmul.f32 %v664, 0.6931472
        %v666 = vlog2.pop %v646
        %v667 = vmul.f32 %v666, 0.6931472
        %v668 = vlog2.pop %v647
        %v669 = vmul.f32 %v668, 0.6931472
        %v670 = vlog2.pop %v648
        %v671 = vmul.f32 %v670, 0.6931472
        %v672 = vlog2.pop %v649
        %v673 = vmul.f32 %v672, 0.6931472
        %v674 = vlog2.pop %v650
        %v675 = vmul.f32 %v674, 0.6931472
        %v676 = vlog2.pop %v651
        %v677 = vmul.f32 %v676, 0.6931472
        %v678 = vlog2.pop %v652
        %v679 = vmul.f32 %v678, 0.6931472
        %v680 = vlog2.pop %v653
        %v681 = vmul.f32 %v680, 0.6931472
        %v682 = vlog2.pop %v654
        %v683 = vmul.f32 %v682, 0.6931472
        %v684 = vlog2.pop %v655
        %v685 = vmul.f32 %v684, 0.6931472
        %v686 = vlog2.pop %v656
        %v687 = vmul.f32 %v686, 0.6931472
        %v688 = vlog2.pop %v657
        %v689 = vmul.f32 %v688, 0.6931472
        %v690 = vadd.f32 %v626, %v659
        %v691 = vadd.f32 %v627, %v661
        %v692 = vadd.f32 %v628, %v663
        %v693 = vadd.f32 %v629, %v665
        %v694 = vadd.f32 %v630, %v667
        %v695 = vadd.f32 %v631, %v669
        %v696 = vadd.f32 %v632, %v671
        %v697 = vadd.f32 %v633, %v673
        %v698 = vadd.f32 %v634, %v675
        %v699 = vadd.f32 %v635, %v677
        %v700 = vadd.f32 %v636, %v679
        %v701 = vadd.f32 %v637, %v681
        %v702 = vadd.f32 %v638, %v683
        %v703 = vadd.f32 %v639, %v685
        %v704 = vadd.f32 %v640, %v687
        %v705 = vadd.f32 %v641, %v689
        %706 = vadd.xlane.f32.xlu0 %v690
        %v707 = vpop.xlane.xlu0 %706
        %708 = vadd.xlane.f32.xlu0 %v691
        %v709 = vpop.xlane.xlu0 %708
        %710 = vadd.xlane.f32.xlu0 %v692
        %v711 = vpop.xlane.xlu0 %710
        %712 = vadd.xlane.f32.xlu0 %v693
        %v713 = vpop.xlane.xlu0 %712
        %714 = vadd.xlane.f32.xlu0 %v694
        %v715 = vpop.xlane.xlu0 %714
        %716 = vadd.xlane.f32.xlu0 %v695
        %v717 = vpop.xlane.xlu0 %716
        %718 = vadd.xlane.f32.xlu0 %v696
        %v719 = vpop.xlane.xlu0 %718
        %720 = vadd.xlane.f32.xlu0 %v697
        %v721 = vpop.xlane.xlu0 %720
        %722 = vadd.xlane.f32.xlu0 %v698
        %v723 = vpop.xlane.xlu0 %722
        %724 = vadd.xlane.f32.xlu0 %v699
        %v725 = vpop.xlane.xlu0 %724
        %726 = vadd.xlane.f32.xlu0 %v700
        %v727 = vpop.xlane.xlu0 %726
        %728 = vadd.xlane.f32.xlu0 %v701
        %v729 = vpop.xlane.xlu0 %728
        %730 = vadd.xlane.f32.xlu0 %v702
        %v731 = vpop.xlane.xlu0 %730
        %732 = vadd.xlane.f32.xlu0 %v703
        %v733 = vpop.xlane.xlu0 %732
        %734 = vadd.xlane.f32.xlu0 %v704
        %v735 = vpop.xlane.xlu0 %734
        %736 = vadd.xlane.f32.xlu0 %v705
        %v737 = vpop.xlane.xlu0 %736
        %v738 = vunpack.c.l.bf16 %v361
        %v739 = vunpack.c.l.bf16 %v362
        %v740 = vunpack.c.l.bf16 %v363
        %v741 = vunpack.c.l.bf16 %v364
        %v742 = vunpack.c.l.bf16 %v365
        %v743 = vunpack.c.l.bf16 %v366
        %v744 = vunpack.c.l.bf16 %v367
        %v745 = vunpack.c.l.bf16 %v368
        %v746 = vunpack.c.l.bf16 %v369
        %v747 = vunpack.c.l.bf16 %v370
        %v748 = vunpack.c.l.bf16 %v371
        %v749 = vunpack.c.l.bf16 %v372
        %v750 = vunpack.c.l.bf16 %v373
        %v751 = vunpack.c.l.bf16 %v374
        %v752 = vunpack.c.l.bf16 %v375
        %v753 = vunpack.c.l.bf16 %v376
        %v754 = vld [vmem:[%s302] sm:$0xf]
        %v755 = vld [vmem:[%s302 + $0x4] sm:$0xf]
        %v756 = vld [vmem:[%s302 + $0x8] sm:$0xf]
        %v757 = vld [vmem:[%s302 + $0xc] sm:$0xf]
        %v758 = vld [vmem:[%s302 + $0x10] sm:$0xf]
        %v759 = vld [vmem:[%s302 + $0x14] sm:$0xf]
        %v760 = vld [vmem:[%s302 + $0x18] sm:$0xf]
        %v761 = vld [vmem:[%s302 + $0x1c] sm:$0xf]
        %v762 = vld [vmem:[%s302 + $0x20] sm:$0xf]
        %v763 = vld [vmem:[%s302 + $0x24] sm:$0xf]
        %v764 = vld [vmem:[%s302 + $0x28] sm:$0xf]
        %v765 = vld [vmem:[%s302 + $0x2c] sm:$0xf]
        %v766 = vld [vmem:[%s302 + $0x30] sm:$0xf]
        %v767 = vld [vmem:[%s302 + $0x34] sm:$0xf]
        %v768 = vld [vmem:[%s302 + $0x38] sm:$0xf]
        %v769 = vld [vmem:[%s302 + $0x3c] sm:$0xf]
        %v770 = vunpack.c.l.bf16 %v754
        %v771 = vunpack.c.l.bf16 %v755
        %v772 = vunpack.c.l.bf16 %v756
        %v773 = vunpack.c.l.bf16 %v757
        %v774 = vunpack.c.l.bf16 %v758
        %v775 = vunpack.c.l.bf16 %v759
        %v776 = vunpack.c.l.bf16 %v760
        %v777 = vunpack.c.l.bf16 %v761
        %v778 = vunpack.c.l.bf16 %v762
        %v779 = vunpack.c.l.bf16 %v763
        %v780 = vunpack.c.l.bf16 %v764
        %v781 = vunpack.c.l.bf16 %v765
        %v782 = vunpack.c.l.bf16 %v766
        %v783 = vunpack.c.l.bf16 %v767
        %v784 = vunpack.c.l.bf16 %v768
        %v785 = vunpack.c.l.bf16 %v769
        %v786 = vmul.f32 %v738, %v770
        %v787 = vmul.f32 %v739, %v771
        %v788 = vmul.f32 %v740, %v772
        %v789 = vmul.f32 %v741, %v773
        %v790 = vmul.f32 %v742, %v774
        %v791 = vmul.f32 %v743, %v775
        %v792 = vmul.f32 %v744, %v776
        %v793 = vmul.f32 %v745, %v777
        %v794 = vmul.f32 %v746, %v778
        %v795 = vmul.f32 %v747, %v779
        %v796 = vmul.f32 %v748, %v780
        %v797 = vmul.f32 %v749, %v781
        %v798 = vmul.f32 %v750, %v782
        %v799 = vmul.f32 %v751, %v783
        %v800 = vmul.f32 %v752, %v784
        %v801 = vmul.f32 %v753, %v785
        %v802 = vsel %vm440, %v786, 0.0
        %803 = vadd.xlane.f32.xlu0 %v802
        %v804 = vpop.xlane.xlu0 %803
        %v805 = vsel %vm440, %v787, 0.0
        %806 = vadd.xlane.f32.xlu0 %v805
        %v807 = vpop.xlane.xlu0 %806
        %v808 = vsel %vm440, %v788, 0.0
        %809 = vadd.xlane.f32.xlu0 %v808
        %v810 = vpop.xlane.xlu0 %809
        %v811 = vsel %vm440, %v789, 0.0
        %812 = vadd.xlane.f32.xlu0 %v811
        %v813 = vpop.xlane.xlu0 %812
        %v814 = vsel %vm440, %v790, 0.0
        %815 = vadd.xlane.f32.xlu0 %v814
        %v816 = vpop.xlane.xlu0 %815
        %v817 = vsel %vm440, %v791, 0.0
        %818 = vadd.xlane.f32.xlu0 %v817
        %v819 = vpop.xlane.xlu0 %818
        %v820 = vsel %vm440, %v792, 0.0
        %821 = vadd.xlane.f32.xlu0 %v820
        %v822 = vpop.xlane.xlu0 %821
        %v823 = vsel %vm440, %v793, 0.0
        %824 = vadd.xlane.f32.xlu0 %v823
        %v825 = vpop.xlane.xlu0 %824
        %v826 = vsel %vm440, %v794, 0.0
        %827 = vadd.xlane.f32.xlu0 %v826
        %v828 = vpop.xlane.xlu0 %827
        %v829 = vsel %vm440, %v795, 0.0
        %830 = vadd.xlane.f32.xlu0 %v829
        %v831 = vpop.xlane.xlu0 %830
        %v832 = vsel %vm440, %v796, 0.0
        %833 = vadd.xlane.f32.xlu0 %v832
        %v834 = vpop.xlane.xlu0 %833
        %v835 = vsel %vm440, %v797, 0.0
        %836 = vadd.xlane.f32.xlu0 %v835
        %v837 = vpop.xlane.xlu0 %836
        %v838 = vsel %vm440, %v798, 0.0
        %839 = vadd.xlane.f32.xlu0 %v838
        %v840 = vpop.xlane.xlu0 %839
        %v841 = vsel %vm440, %v799, 0.0
        %842 = vadd.xlane.f32.xlu0 %v841
        %v843 = vpop.xlane.xlu0 %842
        %v844 = vsel %vm440, %v800, 0.0
        %845 = vadd.xlane.f32.xlu0 %v844
        %v846 = vpop.xlane.xlu0 %845
        %v847 = vsel %vm440, %v801, 0.0
        %848 = vadd.xlane.f32.xlu0 %v847
        %v849 = vpop.xlane.xlu0 %848
        %v850 = vld [vmem:[%s310] sm:$0x1]
        %v852 = vlaneseq
        %v853 = vshrl.u32 %v852, 7
        %v854 = vsub.s32 0, %v853
        %v855 = vrot.slane %v850, %v854
        %857 = vbcast.lane.b32.xlu0 %v855, 256
        %v858 = vpop.permute.xlu0 %857
        %s860 = sor.u32 256, 8
        %861 = vbcast.lane.b32.xlu0 %v855, %s860
        %v862 = vpop.permute.xlu0 %861
        %s864 = sor.u32 256, 16
        %865 = vbcast.lane.b32.xlu0 %v855, %s864
        %v866 = vpop.permute.xlu0 %865
        %s868 = sor.u32 256, 24
        %869 = vbcast.lane.b32.xlu0 %v855, %s868
        %v870 = vpop.permute.xlu0 %869
        %s872 = sor.u32 256, 32
        %873 = vbcast.lane.b32.xlu0 %v855, %s872
        %v874 = vpop.permute.xlu0 %873
        %s876 = sor.u32 256, 40
        %877 = vbcast.lane.b32.xlu0 %v855, %s876
        %v878 = vpop.permute.xlu0 %877
        %s880 = sor.u32 256, 48
        %881 = vbcast.lane.b32.xlu0 %v855, %s880
        %v882 = vpop.permute.xlu0 %881
        %s884 = sor.u32 256, 56
        %885 = vbcast.lane.b32.xlu0 %v855, %s884
        %v886 = vpop.permute.xlu0 %885
        %s888 = sor.u32 256, 64
        %889 = vbcast.lane.b32.xlu0 %v855, %s888
        %v890 = vpop.permute.xlu0 %889
        %s892 = sor.u32 256, 72
        %893 = vbcast.lane.b32.xlu0 %v855, %s892
        %v894 = vpop.permute.xlu0 %893
        %s896 = sor.u32 256, 80
        %897 = vbcast.lane.b32.xlu0 %v855, %s896
        %v898 = vpop.permute.xlu0 %897
        %s900 = sor.u32 256, 88
        %901 = vbcast.lane.b32.xlu0 %v855, %s900
        %v902 = vpop.permute.xlu0 %901
        %s904 = sor.u32 256, 96
        %905 = vbcast.lane.b32.xlu0 %v855, %s904
        %v906 = vpop.permute.xlu0 %905
        %s908 = sor.u32 256, 104
        %909 = vbcast.lane.b32.xlu0 %v855, %s908
        %v910 = vpop.permute.xlu0 %909
        %s912 = sor.u32 256, 112
        %913 = vbcast.lane.b32.xlu0 %v855, %s912
        %v914 = vpop.permute.xlu0 %913
        %s916 = sor.u32 256, 120
        %917 = vbcast.lane.b32.xlu0 %v855, %s916
        %v918 = vpop.permute.xlu0 %917
        %v935 = vadd.f32 %v804, %v858
        %v936 = vadd.f32 %v807, %v862
        %v937 = vadd.f32 %v810, %v866
        %v938 = vadd.f32 %v813, %v870
        %v939 = vadd.f32 %v816, %v874
        %v940 = vadd.f32 %v819, %v878
        %v941 = vadd.f32 %v822, %v882
        %v942 = vadd.f32 %v825, %v886
        %v943 = vadd.f32 %v828, %v890
        %v944 = vadd.f32 %v831, %v894
        %v945 = vadd.f32 %v834, %v898
        %v946 = vadd.f32 %v837, %v902
        %v947 = vadd.f32 %v840, %v906
        %v948 = vadd.f32 %v843, %v910
        %v949 = vadd.f32 %v846, %v914
        %v950 = vadd.f32 %v849, %v918
        %v951 = vand.u32 2147483647, %v935
        %v952 = vand.u32 2147483647, %v936
        %v953 = vand.u32 2147483647, %v937
        %v954 = vand.u32 2147483647, %v938
        %v955 = vand.u32 2147483647, %v939
        %v956 = vand.u32 2147483647, %v940
        %v957 = vand.u32 2147483647, %v941
        %v958 = vand.u32 2147483647, %v942
        %v959 = vand.u32 2147483647, %v943
        %v960 = vand.u32 2147483647, %v944
        %v961 = vand.u32 2147483647, %v945
        %v962 = vand.u32 2147483647, %v946
        %v963 = vand.u32 2147483647, %v947
        %v964 = vand.u32 2147483647, %v948
        %v965 = vand.u32 2147483647, %v949
        %v966 = vand.u32 2147483647, %v950
        %v967 = vsub.f32 0.0, %v951
        %v968 = vsub.f32 0.0, %v952
        %v969 = vsub.f32 0.0, %v953
        %v970 = vsub.f32 0.0, %v954
        %v971 = vsub.f32 0.0, %v955
        %v972 = vsub.f32 0.0, %v956
        %v973 = vsub.f32 0.0, %v957
        %v974 = vsub.f32 0.0, %v958
        %v975 = vsub.f32 0.0, %v959
        %v976 = vsub.f32 0.0, %v960
        %v977 = vsub.f32 0.0, %v961
        %v978 = vsub.f32 0.0, %v962
        %v979 = vsub.f32 0.0, %v963
        %v980 = vsub.f32 0.0, %v964
        %v981 = vsub.f32 0.0, %v965
        %v982 = vsub.f32 0.0, %v966
        %v983 = vmul.f32 %v967, 1.442695
        %v984 = vpow.pop %v983
        %v985 = vmul.f32 %v968, 1.442695
        %v986 = vpow.pop %v985
        %v987 = vmul.f32 %v969, 1.442695
        %v988 = vpow.pop %v987
        %v989 = vmul.f32 %v970, 1.442695
        %v990 = vpow.pop %v989
        %v991 = vmul.f32 %v971, 1.442695
        %v992 = vpow.pop %v991
        %v993 = vmul.f32 %v972, 1.442695
        %v994 = vpow.pop %v993
        %v995 = vmul.f32 %v973, 1.442695
        %v996 = vpow.pop %v995
        %v997 = vmul.f32 %v974, 1.442695
        %v998 = vpow.pop %v997
        %v999 = vmul.f32 %v975, 1.442695
        %v1000 = vpow.pop %v999
        %v1001 = vmul.f32 %v976, 1.442695
        %v1002 = vpow.pop %v1001
        %v1003 = vmul.f32 %v977, 1.442695
        %v1004 = vpow.pop %v1003
        %v1005 = vmul.f32 %v978, 1.442695
        %v1006 = vpow.pop %v1005
        %v1007 = vmul.f32 %v979, 1.442695
        %v1008 = vpow.pop %v1007
        %v1009 = vmul.f32 %v980, 1.442695
        %v1010 = vpow.pop %v1009
        %v1011 = vmul.f32 %v981, 1.442695
        %v1012 = vpow.pop %v1011
        %v1013 = vmul.f32 %v982, 1.442695
        %v1014 = vpow.pop %v1013
        %v1015 = vsub.f32 0.0, %v935
        %v1016 = vsub.f32 0.0, %v936
        %v1017 = vsub.f32 0.0, %v937
        %v1018 = vsub.f32 0.0, %v938
        %v1019 = vsub.f32 0.0, %v939
        %v1020 = vsub.f32 0.0, %v940
        %v1021 = vsub.f32 0.0, %v941
        %v1022 = vsub.f32 0.0, %v942
        %v1023 = vsub.f32 0.0, %v943
        %v1024 = vsub.f32 0.0, %v944
        %v1025 = vsub.f32 0.0, %v945
        %v1026 = vsub.f32 0.0, %v946
        %v1027 = vsub.f32 0.0, %v947
        %v1028 = vsub.f32 0.0, %v948
        %v1029 = vsub.f32 0.0, %v949
        %v1030 = vsub.f32 0.0, %v950
        %v1031 = vmax.f32 %v1015, 0.0
        %v1032 = vmax.f32 %v1016, 0.0
        %v1033 = vmax.f32 %v1017, 0.0
        %v1034 = vmax.f32 %v1018, 0.0
        %v1035 = vmax.f32 %v1019, 0.0
        %v1036 = vmax.f32 %v1020, 0.0
        %v1037 = vmax.f32 %v1021, 0.0
        %v1038 = vmax.f32 %v1022, 0.0
        %v1039 = vmax.f32 %v1023, 0.0
        %v1040 = vmax.f32 %v1024, 0.0
        %v1041 = vmax.f32 %v1025, 0.0
        %v1042 = vmax.f32 %v1026, 0.0
        %v1043 = vmax.f32 %v1027, 0.0
        %v1044 = vmax.f32 %v1028, 0.0
        %v1045 = vmax.f32 %v1029, 0.0
        %v1046 = vmax.f32 %v1030, 0.0
        %v1047 = vadd.f32 %v984, 1.0
        %v1048 = vadd.f32 %v986, 1.0
        %v1049 = vadd.f32 %v988, 1.0
        %v1050 = vadd.f32 %v990, 1.0
        %v1051 = vadd.f32 %v992, 1.0
        %v1052 = vadd.f32 %v994, 1.0
        %v1053 = vadd.f32 %v996, 1.0
        %v1054 = vadd.f32 %v998, 1.0
        %v1055 = vadd.f32 %v1000, 1.0
        %v1056 = vadd.f32 %v1002, 1.0
        %v1057 = vadd.f32 %v1004, 1.0
        %v1058 = vadd.f32 %v1006, 1.0
        %v1059 = vadd.f32 %v1008, 1.0
        %v1060 = vadd.f32 %v1010, 1.0
        %v1061 = vadd.f32 %v1012, 1.0
        %v1062 = vadd.f32 %v1014, 1.0
        %v1063 = vlog2.pop %v1047
        %v1064 = vmul.f32 %v1063, 0.6931472
        %v1065 = vlog2.pop %v1048
        %v1066 = vmul.f32 %v1065, 0.6931472
        %v1067 = vlog2.pop %v1049
        %v1068 = vmul.f32 %v1067, 0.6931472
        %v1069 = vlog2.pop %v1050
        %v1070 = vmul.f32 %v1069, 0.6931472
        %v1071 = vlog2.pop %v1051
        %v1072 = vmul.f32 %v1071, 0.6931472
        %v1073 = vlog2.pop %v1052
        %v1074 = vmul.f32 %v1073, 0.6931472
        %v1075 = vlog2.pop %v1053
        %v1076 = vmul.f32 %v1075, 0.6931472
        %v1077 = vlog2.pop %v1054
        %v1078 = vmul.f32 %v1077, 0.6931472
        %v1079 = vlog2.pop %v1055
        %v1080 = vmul.f32 %v1079, 0.6931472
        %v1081 = vlog2.pop %v1056
        %v1082 = vmul.f32 %v1081, 0.6931472
        %v1083 = vlog2.pop %v1057
        %v1084 = vmul.f32 %v1083, 0.6931472
        %v1085 = vlog2.pop %v1058
        %v1086 = vmul.f32 %v1085, 0.6931472
        %v1087 = vlog2.pop %v1059
        %v1088 = vmul.f32 %v1087, 0.6931472
        %v1089 = vlog2.pop %v1060
        %v1090 = vmul.f32 %v1089, 0.6931472
        %v1091 = vlog2.pop %v1061
        %v1092 = vmul.f32 %v1091, 0.6931472
        %v1093 = vlog2.pop %v1062
        %v1094 = vmul.f32 %v1093, 0.6931472
        %v1095 = vadd.f32 %v1031, %v1064
        %v1096 = vadd.f32 %v1032, %v1066
        %v1097 = vadd.f32 %v1033, %v1068
        %v1098 = vadd.f32 %v1034, %v1070
        %v1099 = vadd.f32 %v1035, %v1072
        %v1100 = vadd.f32 %v1036, %v1074
        %v1101 = vadd.f32 %v1037, %v1076
        %v1102 = vadd.f32 %v1038, %v1078
        %v1103 = vadd.f32 %v1039, %v1080
        %v1104 = vadd.f32 %v1040, %v1082
        %v1105 = vadd.f32 %v1041, %v1084
        %v1106 = vadd.f32 %v1042, %v1086
        %v1107 = vadd.f32 %v1043, %v1088
        %v1108 = vadd.f32 %v1044, %v1090
        %v1109 = vadd.f32 %v1045, %v1092
        %v1110 = vadd.f32 %v1046, %v1094
        %s1111 = smul.u32 %s23, 128
        %v1112 = vlaneseq
        %v1113 = vshrl.u32 %v1112, 7
        %v1114 = vmul.u32 %v1113, 128
        %v1115 = vstv %s1111
        %v1116 = vadd.s32 %v1115, %v1114
        %v1117 = vlaneseq
        %v1118 = vand.u32 %v1117, 127
        %v1119 = vadd.s32 %v1116, %v1118
        %v1120 = vadd.s32 %v1113, 8
        %v1121 = vadd.s32 %v1113, 16
        %v1122 = vadd.s32 %v1113, 24
        %v1123 = vadd.s32 %v1113, 32
        %v1124 = vadd.s32 %v1113, 40
        %v1125 = vadd.s32 %v1113, 48
        %v1126 = vadd.s32 %v1113, 56
        %v1127 = vadd.s32 %v1113, 64
        %v1128 = vadd.s32 %v1113, 72
        %v1129 = vadd.s32 %v1113, 80
        %v1130 = vadd.s32 %v1113, 88
        %v1131 = vadd.s32 %v1113, 96
        %v1132 = vadd.s32 %v1113, 104
        %v1133 = vadd.s32 %v1113, 112
        %v1134 = vadd.s32 %v1113, 120
        %v1135 = vadd.s32 %v1115, %v1113
        %v1136 = vadd.s32 %v1115, %v1120
        %v1137 = vadd.s32 %v1115, %v1121
        %v1138 = vadd.s32 %v1115, %v1122
        %v1139 = vadd.s32 %v1115, %v1123
        %v1140 = vadd.s32 %v1115, %v1124
        %v1141 = vadd.s32 %v1115, %v1125
        %v1142 = vadd.s32 %v1115, %v1126
        %v1143 = vadd.s32 %v1115, %v1127
        %v1144 = vadd.s32 %v1115, %v1128
        %v1145 = vadd.s32 %v1115, %v1129
        %v1146 = vadd.s32 %v1115, %v1130
        %v1147 = vadd.s32 %v1115, %v1131
        %v1148 = vadd.s32 %v1115, %v1132
        %v1149 = vadd.s32 %v1115, %v1133
        %v1150 = vadd.s32 %v1115, %v1134
        %vm1151 = vcmp.lt.s32.totalorder %v1119, 192
        %1168 = vset.pattern.permute.xlu0 0
        %1169 = vperm.xlu0 %1168, %v1095
        %v1170 = vpop.permute.xlu0 %1169
        %1171 = vset.pattern.permute.xlu0 0
        %1172 = vperm.xlu0 %1171, %v1096
        %v1173 = vpop.permute.xlu0 %1172
        %1174 = vset.pattern.permute.xlu0 0
        %1175 = vperm.xlu0 %1174, %v1097
        %v1176 = vpop.permute.xlu0 %1175
        %1177 = vset.pattern.permute.xlu0 0
        %1178 = vperm.xlu0 %1177, %v1098
        %v1179 = vpop.permute.xlu0 %1178
        %1180 = vset.pattern.permute.xlu0 0
        %1181 = vperm.xlu0 %1180, %v1099
        %v1182 = vpop.permute.xlu0 %1181
        %1183 = vset.pattern.permute.xlu0 0
        %1184 = vperm.xlu0 %1183, %v1100
        %v1185 = vpop.permute.xlu0 %1184
        %1186 = vset.pattern.permute.xlu0 0
        %1187 = vperm.xlu0 %1186, %v1101
        %v1188 = vpop.permute.xlu0 %1187
        %1189 = vset.pattern.permute.xlu0 0
        %1190 = vperm.xlu0 %1189, %v1102
        %v1191 = vpop.permute.xlu0 %1190
        %1192 = vset.pattern.permute.xlu0 0
        %1193 = vperm.xlu0 %1192, %v1103
        %v1194 = vpop.permute.xlu0 %1193
        %1195 = vset.pattern.permute.xlu0 0
        %1196 = vperm.xlu0 %1195, %v1104
        %v1197 = vpop.permute.xlu0 %1196
        %1198 = vset.pattern.permute.xlu0 0
        %1199 = vperm.xlu0 %1198, %v1105
        %v1200 = vpop.permute.xlu0 %1199
        %1201 = vset.pattern.permute.xlu0 0
        %1202 = vperm.xlu0 %1201, %v1106
        %v1203 = vpop.permute.xlu0 %1202
        %1204 = vset.pattern.permute.xlu0 0
        %1205 = vperm.xlu0 %1204, %v1107
        %v1206 = vpop.permute.xlu0 %1205
        %1207 = vset.pattern.permute.xlu0 0
        %1208 = vperm.xlu0 %1207, %v1108
        %v1209 = vpop.permute.xlu0 %1208
        %1210 = vset.pattern.permute.xlu0 0
        %1211 = vperm.xlu0 %1210, %v1109
        %v1212 = vpop.permute.xlu0 %1211
        %1213 = vset.pattern.permute.xlu0 0
        %1214 = vperm.xlu0 %1213, %v1110
        %v1215 = vpop.permute.xlu0 %1214
        %v1216 = vlaneseq
        %v1217 = vshrl.u32 %v1216, 7
        %v1218 = vsub.s32 %v1118, %v1217
        %v1219 = vrot.slane %v1170, %v1218
        %v1220 = vadd.s32 %v1118, 4294967288
        %v1221 = vlaneseq
        %v1222 = vshrl.u32 %v1221, 7
        %v1223 = vsub.s32 %v1220, %v1222
        %v1224 = vrot.slane %v1173, %v1223
        %vm1225 = vcmask 130112
        %v1226 = vsel %vm1225, %v1224, %v1219
        %v1227 = vadd.s32 %v1118, 4294967280
        %v1228 = vlaneseq
        %v1229 = vshrl.u32 %v1228, 7
        %v1230 = vsub.s32 %v1227, %v1229
        %v1231 = vrot.slane %v1176, %v1230
        %vm1232 = vcmask 195712
        %v1233 = vsel %vm1232, %v1231, %v1226
        %v1234 = vadd.s32 %v1118, 4294967272
        %v1235 = vlaneseq
        %v1236 = vshrl.u32 %v1235, 7
        %v1237 = vsub.s32 %v1234, %v1236
        %v1238 = vrot.slane %v1179, %v1237
        %vm1239 = vcmask 261312
        %v1240 = vsel %vm1239, %v1238, %v1233
        %v1241 = vadd.s32 %v1118, 4294967264
        %v1242 = vlaneseq
        %v1243 = vshrl.u32 %v1242, 7
        %v1244 = vsub.s32 %v1241, %v1243
        %v1245 = vrot.slane %v1182, %v1244
        %vm1246 = vcmask 326912
        %v1247 = vsel %vm1246, %v1245, %v1240
        %v1248 = vadd.s32 %v1118, 4294967256
        %v1249 = vlaneseq
        %v1250 = vshrl.u32 %v1249, 7
        %v1251 = vsub.s32 %v1248, %v1250
        %v1252 = vrot.slane %v1185, %v1251
        %vm1253 = vcmask 392512
        %v1254 = vsel %vm1253, %v1252, %v1247
        %v1255 = vadd.s32 %v1118, 4294967248
        %v1256 = vlaneseq
        %v1257 = vshrl.u32 %v1256, 7
        %v1258 = vsub.s32 %v1255, %v1257
        %v1259 = vrot.slane %v1188, %v1258
        %vm1260 = vcmask 458112
        %v1261 = vsel %vm1260, %v1259, %v1254
        %v1262 = vadd.s32 %v1118, 4294967240
        %v1263 = vlaneseq
        %v1264 = vshrl.u32 %v1263, 7
        %v1265 = vsub.s32 %v1262, %v1264
        %v1266 = vrot.slane %v1191, %v1265
        %vm1267 = vcmask 523712
        %v1268 = vsel %vm1267, %v1266, %v1261
        %v1269 = vadd.s32 %v1118, 4294967232
        %v1270 = vlaneseq
        %v1271 = vshrl.u32 %v1270, 7
        %v1272 = vsub.s32 %v1269, %v1271
        %v1273 = vrot.slane %v1194, %v1272
        %vm1274 = vcmask 589312
        %v1275 = vsel %vm1274, %v1273, %v1268
        %v1276 = vadd.s32 %v1118, 4294967224
        %v1277 = vlaneseq
        %v1278 = vshrl.u32 %v1277, 7
        %v1279 = vsub.s32 %v1276, %v1278
        %v1280 = vrot.slane %v1197, %v1279
        %vm1281 = vcmask 654912
        %v1282 = vsel %vm1281, %v1280, %v1275
        %v1283 = vadd.s32 %v1118, 4294967216
        %v1284 = vlaneseq
        %v1285 = vshrl.u32 %v1284, 7
        %v1286 = vsub.s32 %v1283, %v1285
        %v1287 = vrot.slane %v1200, %v1286
        %vm1288 = vcmask 720512
        %v1289 = vsel %vm1288, %v1287, %v1282
        %v1290 = vadd.s32 %v1118, 4294967208
        %v1291 = vlaneseq
        %v1292 = vshrl.u32 %v1291, 7
        %v1293 = vsub.s32 %v1290, %v1292
        %v1294 = vrot.slane %v1203, %v1293
        %vm1295 = vcmask 786112
        %v1296 = vsel %vm1295, %v1294, %v1289
        %v1297 = vadd.s32 %v1118, 4294967200
        %v1298 = vlaneseq
        %v1299 = vshrl.u32 %v1298, 7
        %v1300 = vsub.s32 %v1297, %v1299
        %v1301 = vrot.slane %v1206, %v1300
        %vm1302 = vcmask 851712
        %v1303 = vsel %vm1302, %v1301, %v1296
        %v1304 = vadd.s32 %v1118, 4294967192
        %v1305 = vlaneseq
        %v1306 = vshrl.u32 %v1305, 7
        %v1307 = vsub.s32 %v1304, %v1306
        %v1308 = vrot.slane %v1209, %v1307
        %vm1309 = vcmask 917312
        %v1310 = vsel %vm1309, %v1308, %v1303
        %v1311 = vadd.s32 %v1118, 4294967184
        %v1312 = vlaneseq
        %v1313 = vshrl.u32 %v1312, 7
        %v1314 = vsub.s32 %v1311, %v1313
        %v1315 = vrot.slane %v1212, %v1314
        %vm1316 = vcmask 982912
        %v1317 = vsel %vm1316, %v1315, %v1310
        %v1318 = vadd.s32 %v1118, 4294967176
        %v1319 = vlaneseq
        %v1320 = vshrl.u32 %v1319, 7
        %v1321 = vsub.s32 %v1318, %v1320
        %v1322 = vrot.slane %v1215, %v1321
        %vm1323 = vcmask 1048512
        %v1324 = vsel %vm1323, %v1322, %v1317
        %v1326 = vsel %vm1151, %v1324, 0.0
        %vm1327 = vcmask 1040384
        %v1328 = vsel %vm1327, %v1326, 0.0
        %1329 = vadd.xlane.f32.xlu0 %v1328
        %v1330 = vpop.xlane.xlu0 %1329
        %v1331 = vrot.slane %v1330, 4
        %v1332 = vadd.f32 %v1330, %v1331
        %v1333 = vrot.slane %v1332, 2
        %v1334 = vadd.f32 %v1332, %v1333
        %v1335 = vrot.slane %v1334, 1
        %v1336 = vadd.f32 %v1334, %v1335
        %s1337 = vtos %v1336
        %vm1338 = vcmp.lt.s32.totalorder %v1135, 192
        %vm1339 = vcmp.lt.s32.totalorder %v1136, 192
        %vm1340 = vcmp.lt.s32.totalorder %v1137, 192
        %vm1341 = vcmp.lt.s32.totalorder %v1138, 192
        %vm1342 = vcmp.lt.s32.totalorder %v1139, 192
        %vm1343 = vcmp.lt.s32.totalorder %v1140, 192
        %vm1344 = vcmp.lt.s32.totalorder %v1141, 192
        %vm1345 = vcmp.lt.s32.totalorder %v1142, 192
        %vm1346 = vcmp.lt.s32.totalorder %v1143, 192
        %vm1347 = vcmp.lt.s32.totalorder %v1144, 192
        %vm1348 = vcmp.lt.s32.totalorder %v1145, 192
        %vm1349 = vcmp.lt.s32.totalorder %v1146, 192
        %vm1350 = vcmp.lt.s32.totalorder %v1147, 192
        %vm1351 = vcmp.lt.s32.totalorder %v1148, 192
        %vm1352 = vcmp.lt.s32.totalorder %v1149, 192
        %vm1353 = vcmp.lt.s32.totalorder %v1150, 192
        %v1354 = vsel %vm1338, %v707, 0.0
        %v1355 = vsel %vm1339, %v709, 0.0
        %v1356 = vsel %vm1340, %v711, 0.0
        %v1357 = vsel %vm1341, %v713, 0.0
        %v1358 = vsel %vm1342, %v715, 0.0
        %v1359 = vsel %vm1343, %v717, 0.0
        %v1360 = vsel %vm1344, %v719, 0.0
        %v1361 = vsel %vm1345, %v721, 0.0
        %v1362 = vsel %vm1346, %v723, 0.0
        %v1363 = vsel %vm1347, %v725, 0.0
        %v1364 = vsel %vm1348, %v727, 0.0
        %v1365 = vsel %vm1349, %v729, 0.0
        %v1366 = vsel %vm1350, %v731, 0.0
        %v1367 = vsel %vm1351, %v733, 0.0
        %v1368 = vsel %vm1352, %v735, 0.0
        %v1369 = vsel %vm1353, %v737, 0.0
        %vm1370 = vcmask 7168
        %v1371 = vsel %vm1370, %v1354, 0.0
        %v1372 = vsel %vm1370, %v1355, 0.0
        %v1373 = vadd.f32 %v1371, %v1372
        %v1374 = vsel %vm1370, %v1356, 0.0
        %v1375 = vadd.f32 %v1373, %v1374
        %v1376 = vsel %vm1370, %v1357, 0.0
        %v1377 = vadd.f32 %v1375, %v1376
        %v1378 = vsel %vm1370, %v1358, 0.0
        %v1379 = vadd.f32 %v1377, %v1378
        %v1380 = vsel %vm1370, %v1359, 0.0
        %v1381 = vadd.f32 %v1379, %v1380
        %v1382 = vsel %vm1370, %v1360, 0.0
        %v1383 = vadd.f32 %v1381, %v1382
        %v1384 = vsel %vm1370, %v1361, 0.0
        %v1385 = vadd.f32 %v1383, %v1384
        %v1386 = vsel %vm1370, %v1362, 0.0
        %v1387 = vadd.f32 %v1385, %v1386
        %v1388 = vsel %vm1370, %v1363, 0.0
        %v1389 = vadd.f32 %v1387, %v1388
        %v1390 = vsel %vm1370, %v1364, 0.0
        %v1391 = vadd.f32 %v1389, %v1390
        %v1392 = vsel %vm1370, %v1365, 0.0
        %v1393 = vadd.f32 %v1391, %v1392
        %v1394 = vsel %vm1370, %v1366, 0.0
        %v1395 = vadd.f32 %v1393, %v1394
        %v1396 = vsel %vm1370, %v1367, 0.0
        %v1397 = vadd.f32 %v1395, %v1396
        %v1398 = vsel %vm1370, %v1368, 0.0
        %v1399 = vadd.f32 %v1397, %v1398
        %v1400 = vsel %vm1370, %v1369, 0.0
        %v1401 = vadd.f32 %v1399, %v1400
        %1402 = vadd.xlane.f32.xlu0 %v1401
        %v1403 = vpop.xlane.xlu0 %1402
        %v1404 = vrot.slane %v1403, 4
        %v1405 = vadd.f32 %v1403, %v1404
        %v1406 = vrot.slane %v1405, 2
        %v1407 = vadd.f32 %v1405, %v1406
        %v1408 = vrot.slane %v1407, 1
        %v1409 = vadd.f32 %v1407, %v1408
        %s1410 = vtos %v1409
        %s1411 = sadd.f32 %s1337, %s1410
        %v1412 = vstv %s1411
        %1413 = vst [vmem:[%s349] sm:$0xff] %v1412
        %s1414 = sand.u32 %s151, 1
        %s1415 = scalar_lea.sflag [#allocation4], %s1414
        %s1416 = sand.u32 %s151, 1
        %s1417 = smul.addr %s1416, 8
        %s1418 = scalar_lea.vmem [#allocation10], %s1417
        // Predicated region
        $region61: #{tpu_custom_call.1} parent=39 // pred_check
          %p1419 = pneg %p161
        $region62: #{tpu_custom_call.1} parent=39 // pred_check_branch
          %1421 = sbr.rel (%p1419) target = $region64
        $region63: #{tpu_custom_call.1} parent=39 // pred_region
          %s1423 = ssub.s32 128, 128
          %1424 = vsyncadd %s1415, %s1423
          %s1425 = smul.addr %s23, 128
          %s1426 = scalar_lea.hbm %s5, %s1425
          %s1428 = sshll.u32 %s1418, 4
          %s1429 = int_to_ptr.vmem [resolvable:$true] %s1428
          %1431 = dma.vmem_to_hbm [thread:$0]  %s1429, 128, %s1426, %s1415
        $region64: #{tpu_custom_call.1} parent=39 // pred_fallthru
          _
      $region40: #{tpu_custom_call.1} parent=5 // pred_fallthru
        _
      %p1432 = scmp.le.s32.totalorder 2, %s18
      // Predicated region
      $region65: #{tpu_custom_call.1} parent=5 // pred_check
        %p1433 = pneg %p1432
      $region66: #{tpu_custom_call.1} parent=5 // pred_check_branch
        %1435 = sbr.rel (%p1433) target = $region68
      $region67: #{tpu_custom_call.1} parent=5 // pred_region
        %s1436 = ssub.s32 %s18, 2
        // Predicated region
        $region69: #{tpu_custom_call.1} parent=67 // pred_check
          %p1437 = pneg %p167
        $region70: #{tpu_custom_call.1} parent=67 // pred_check_branch
          %1439 = sbr.rel (%p1437) target = $region72
        $region71: #{tpu_custom_call.1} parent=67 // pred_region
          %s1440 = sand.u32 %s152, 1
          %s1441 = scalar_lea.sflag [#allocation4], %s1440
          %s1442 = sand.u32 %s152, 1
          %s1443 = smul.addr %s1442, 8
          %s1444 = scalar_lea.vmem [#allocation10], %s1443
          %1445 = dma.done %s1441, 128
        $region72: #{tpu_custom_call.1} parent=67 // pred_fallthru
          _
      $region68: #{tpu_custom_call.1} parent=5 // pred_fallthru
        _
    $region6: #{tpu_custom_call.1} parent=1 // loop_footer
      %s22 = sadd.s32 1, %s18
    $region7: #{tpu_custom_call.1} parent=1 // loop_footer_branch
      %17 = sbr.rel target = $region3
    $region8: #{tpu_custom_call.1} parent=1 // loop_exit
      _
    %1446 = vsyncpa [#allocation3], 1
    %s1447 = scalar_lea.sflag [#allocation3], 1
    %1448 = vsyncpa %s1447, 1
    %1449 = vsyncpa [#allocation6], 1
    %1450 = vsyncpa [#allocation4], 1
    %s1451 = scalar_lea.sflag [#allocation4], 1
    %1452 = vsyncpa %s1451, 1

</llo_original>
